<compile_context>
chip_gen: v6e
topology: v6e:2x2x1
jax: 0.10.0
libtpu: 0.0.40
codegen_flags: <defaults>
</compile_context>

<pallas_src>
import jax
import jax.numpy as jnp
from jax import lax
from jax.experimental import pallas as pl
from jax.experimental.pallas import tpu as pltpu

IN_FEATURES = 2048
HIDDEN = 512
FEATURE_DIM = 128
K_TILE = 512                      # contraction tile for the first matmul
BN_EPS = 1e-5
NORM_EPS = 1e-12


def _projection_head_kernel(x_ref, w1_ref, gamma_ref, beta_ref, w2_ref, b2_ref,
                            o_ref, h_acc):
    k = pl.program_id(0)

    # ---- init f32 accumulator for h = x @ W1 on the first K step ----
    @pl.when(k == 0)
    def _init():
        h_acc[...] = jnp.zeros_like(h_acc)

    # ---- Linear(2048 -> 512, bias=False): accumulate one K chunk (MXU) ----
    h_acc[...] += jnp.dot(x_ref[...], w1_ref[...],
                          preferred_element_type=jnp.float32)

    # ---- epilogue on the last K step: BN -> ReLU -> Linear -> normalize ----
    @pl.when(k == pl.num_programs(0) - 1)
    def _finalize():
        h = h_acc[...]                                         # (B, 512) f32

        # BatchNorm1d(512), training mode: biased batch variance, eps=1e-5.
        mean = jnp.mean(h, axis=0, keepdims=True)              # (1, 512)
        diff = h - mean
        var = jnp.mean(diff * diff, axis=0, keepdims=True)
        h_bn = diff * lax.rsqrt(var + BN_EPS) * gamma_ref[...] + beta_ref[...]

        # ReLU
        h_relu = jnp.maximum(h_bn, jnp.float32(0.0))

        # Linear(512 -> feature_dim, bias=True)  (MXU, f32 accumulation)
        out = jnp.dot(h_relu.astype(w2_ref.dtype), w2_ref[...],
                      preferred_element_type=jnp.float32)
        out = out + b2_ref[...]

        # F.normalize(out, dim=-1): clamp ||x||^2 at eps^2, rsqrt on the EUP.
        sumsq = jnp.sum(out * out, axis=-1, keepdims=True)
        inv = lax.rsqrt(jnp.maximum(sumsq, jnp.float32(NORM_EPS * NORM_EPS)))
        o_ref[...] = (out * inv).astype(o_ref.dtype)


def projection_head_for32(x_nchw, w1, gamma, beta, w2, b2, *, use_bf16=True):
    """Pallas implementation of projectionhead_for32.forward.

    x_nchw: (B, C, H, W) with C*H*W == 2048 (NCHW, like PyTorch).
    use_bf16: feed MXU operands (x, W1, W2) as bf16 (faster / less HBM
              traffic; not bit-identical to the f32 PyTorch reference).
    Returns: (B, FEATURE_DIM) float32, unit-L2-normalized rows.
    """
    B = x_nchw.shape[0]
    x = x_nchw.reshape(B, -1)                                  # (B, 2048)
    assert x.shape[1] == IN_FEATURES

    mxu_dtype = jnp.bfloat16 if use_bf16 else jnp.float32
    x = x.astype(mxu_dtype)
    w1c = w1.astype(mxu_dtype)
    w2c = w2.astype(mxu_dtype)
    gamma2d = gamma.reshape(1, HIDDEN).astype(jnp.float32)
    beta2d = beta.reshape(1, HIDDEN).astype(jnp.float32)
    b2_2d = b2.reshape(1, FEATURE_DIM).astype(jnp.float32)

    n_k = IN_FEATURES // K_TILE

    # TODO(synk): for very large training batches (B >~ 4K) the (B, K_TILE)
    # input block + (B, HIDDEN) accumulator should be batch-tiled with a
    # two-pass BN (sum / sum-of-squares scratch) to stay inside v7x's 64 MiB
    # VMEM; not needed at inference-sized batches.

    itemsize = jnp.dtype(mxu_dtype).itemsize
    bytes_accessed = (
        B * IN_FEATURES * itemsize            # x
        + IN_FEATURES * HIDDEN * itemsize     # W1 (dominant)
        + HIDDEN * FEATURE_DIM * itemsize     # W2
        + (2 * HIDDEN + FEATURE_DIM) * 4      # gamma, beta, b2
        + B * FEATURE_DIM * 4                 # output
    )
    cost = pl.CostEstimate(
        flops=2 * B * IN_FEATURES * HIDDEN + 2 * B * HIDDEN * FEATURE_DIM,
        transcendentals=HIDDEN + B,           # rsqrt in BN + normalize
        bytes_accessed=bytes_accessed,
    )

    out = pl.pallas_call(
        _projection_head_kernel,
        out_shape=jax.ShapeDtypeStruct((B, FEATURE_DIM), jnp.float32),
        grid_spec=pltpu.PrefetchScalarGridSpec(
            num_scalar_prefetch=0,
            grid=(n_k,),
            in_specs=[
                pl.BlockSpec((B, K_TILE), lambda k: (0, k)),          # x chunk
                pl.BlockSpec((K_TILE, HIDDEN), lambda k: (k, 0)),     # W1 chunk
                pl.BlockSpec((1, HIDDEN), lambda k: (0, 0)),          # gamma
                pl.BlockSpec((1, HIDDEN), lambda k: (0, 0)),          # beta
                pl.BlockSpec((HIDDEN, FEATURE_DIM), lambda k: (0, 0)),  # W2
                pl.BlockSpec((1, FEATURE_DIM), lambda k: (0, 0)),     # b2
            ],
            out_specs=pl.BlockSpec((B, FEATURE_DIM), lambda k: (0, 0)),
            scratch_shapes=[pltpu.VMEM((B, HIDDEN), jnp.float32)],
        ),
        compiler_params=pltpu.CompilerParams(
            dimension_semantics=("arbitrary",),   # K is a reduction axis
            vmem_limit_bytes=32 << 20,
        ),
        cost_estimate=cost,
    )(x, w1c, gamma2d, beta2d, w2c, b2_2d)
    return out


def _reference(x_nchw, w1, gamma, beta, w2, b2):
    """Pure-JAX f32 reference mirroring the PyTorch forward (training BN)."""
    B = x_nchw.shape[0]
    x = x_nchw.reshape(B, -1).astype(jnp.float32)
    h = x @ w1.astype(jnp.float32)
    mean = jnp.mean(h, axis=0, keepdims=True)
    var = jnp.mean((h - mean) ** 2, axis=0, keepdims=True)
    h = (h - mean) / jnp.sqrt(var + BN_EPS) * gamma + beta
    h = jnp.maximum(h, 0.0)
    out = h @ w2.astype(jnp.float32) + b2
    norm = jnp.sqrt(jnp.sum(out * out, axis=-1, keepdims=True))
    return out / jnp.maximum(norm, NORM_EPS)


if __name__ == "__main__":
    key = jax.random.PRNGKey(0)
    k_x, k_w1, k_w2, k_b2 = jax.random.split(key, 4)

    # Small input consistent with the module: NCHW with C*H*W = 2048.
    B, C, H, W = 8, 128, 4, 4
    x = jax.random.normal(k_x, (B, C, H, W), dtype=jnp.float32)

    # Deterministic parameter init (PyTorch-style uniform bounds for Linear;
    # BatchNorm1d defaults gamma=1, beta=0).
    bound1 = 1.0 / (IN_FEATURES ** 0.5)
    w1 = jax.random.uniform(k_w1, (IN_FEATURES, HIDDEN), jnp.float32,
                            minval=-bound1, maxval=bound1)
    gamma = jnp.ones((HIDDEN,), jnp.float32)
    beta = jnp.zeros((HIDDEN,), jnp.float32)
    bound2 = 1.0 / (HIDDEN ** 0.5)
    w2 = jax.random.uniform(k_w2, (HIDDEN, FEATURE_DIM), jnp.float32,
                            minval=-bound2, maxval=bound2)
    b2 = jax.random.uniform(k_b2, (FEATURE_DIM,), jnp.float32,
                            minval=-bound2, maxval=bound2)

    ref = _reference(x, w1, gamma, beta, w2, b2)

    # 1) f32 path: exact parity with the PyTorch-equivalent reference.
    out_f32 = jax.block_until_ready(
        projection_head_for32(x, w1, gamma, beta, w2, b2, use_bf16=False))
    assert out_f32.shape == (B, FEATURE_DIM)
    assert jnp.allclose(out_f32, ref, atol=2e-5, rtol=1e-5), \
        "f32 kernel mismatch vs reference"

    # 2) bf16-MXU path (default, fast): close to reference, rows unit-norm.
    out_bf16 = jax.block_until_ready(
        projection_head_for32(x, w1, gamma, beta, w2, b2, use_bf16=True))
    assert out_bf16.shape == (B, FEATURE_DIM)
    assert jnp.allclose(out_bf16, ref, atol=2e-2), \
        "bf16 kernel mismatch vs reference"
    assert jnp.allclose(jnp.sum(out_bf16 * out_bf16, axis=-1), 1.0, atol=1e-4)

    print("KERNEL_OK")
</pallas_src>

<mosaic_0001>
module attributes {stable_mosaic.version = 11 : i64} {
  func.func @_projection_head_kernel(%arg0: i32, %arg1: memref<8x512xf32, #tpu.memory_space<vmem>>, %arg2: memref<512x512xf32, #tpu.memory_space<vmem>>, %arg3: memref<1x512xf32, #tpu.memory_space<vmem>>, %arg4: memref<1x512xf32, #tpu.memory_space<vmem>>, %arg5: memref<512x128xf32, #tpu.memory_space<vmem>>, %arg6: memref<1x128xf32, #tpu.memory_space<vmem>>, %arg7: memref<8x128xf32, #tpu.memory_space<vmem>>, %arg8: memref<8x512xf32, #tpu.memory_space<vmem>>) attributes {dimension_semantics = [#tpu.dimension_semantics<arbitrary>], iteration_bounds = array<i64: 4>, scalar_prefetch = 0 : i64, scratch_operands = 1 : i64, tpu.core_type = #tpu.core_type<tc>, window_params = [{transform_indices = @transform_0, window_bounds = array<i64: 8, 512>}, {transform_indices = @transform_1, window_bounds = array<i64: 512, 512>}, {pipeline_mode = #tpu.pipeline_mode<synchronous>, transform_indices = @transform_2, window_bounds = array<i64: 1, 512>}, {pipeline_mode = #tpu.pipeline_mode<synchronous>, transform_indices = @transform_3, window_bounds = array<i64: 1, 512>}, {pipeline_mode = #tpu.pipeline_mode<synchronous>, transform_indices = @transform_4, window_bounds = array<i64: 512, 128>}, {pipeline_mode = #tpu.pipeline_mode<synchronous>, transform_indices = @transform_5, window_bounds = array<i64: 1, 128>}, {pipeline_mode = #tpu.pipeline_mode<synchronous>, transform_indices = @transform_6, window_bounds = array<i64: 8, 128>}]} {
    %c0_i32 = arith.constant 0 : i32
    %0 = arith.cmpi eq, %arg0, %c0_i32 : i32
    %1 = arith.extui %0 : i1 to i32
    %c0_i32_0 = arith.constant 0 : i32
    %2 = arith.cmpi ne, %1, %c0_i32_0 : i32
    scf.if %2 {
      %cst_9 = arith.constant 0.000000e+00 : f32
      %12 = vector.broadcast %cst_9 : f32 to vector<8x512xf32>
      %c0_10 = arith.constant 0 : index
      %c0_11 = arith.constant 0 : index
      %13 = vector.load %arg8[%c0_10, %c0_11] : memref<8x512xf32, #tpu.memory_space<vmem>>, vector<8x512xf32>
      tpu.vector_store %arg8[%c0_10, %c0_11], %12 {strides = array<i32>} : memref<8x512xf32, #tpu.memory_space<vmem>>, vector<8x512xf32>,
    } else {
    }
    %c0 = arith.constant 0 : index
    %c0_1 = arith.constant 0 : index
    %3 = vector.load %arg8[%c0, %c0_1] : memref<8x512xf32, #tpu.memory_space<vmem>>, vector<8x512xf32>
    %c0_2 = arith.constant 0 : index
    %c0_3 = arith.constant 0 : index
    %4 = vector.load %arg1[%c0_2, %c0_3] : memref<8x512xf32, #tpu.memory_space<vmem>>, vector<8x512xf32>
    %c0_4 = arith.constant 0 : index
    %c0_5 = arith.constant 0 : index
    %5 = vector.load %arg2[%c0_4, %c0_5] : memref<512x512xf32, #tpu.memory_space<vmem>>, vector<512x512xf32>
    %cst = arith.constant dense<0.000000e+00> : vector<8x512xf32>
    %6 = tpu.matmul %4, %5, %cst {dimension_numbers = #tpu.dot_dimension_numbers<[1], [0], [0], [1], [0, 0, 1, 1], [], []>} : vector<8x512xf32>, vector<512x512xf32>, vector<8x512xf32> -> vector<8x512xf32>
    %7 = arith.addf %3, %6 : vector<8x512xf32>
    %c0_6 = arith.constant 0 : index
    %c0_7 = arith.constant 0 : index
    %8 = vector.load %arg8[%c0_6, %c0_7] : memref<8x512xf32, #tpu.memory_space<vmem>>, vector<8x512xf32>
    tpu.vector_store %arg8[%c0_6, %c0_7], %7 {strides = array<i32>} : memref<8x512xf32, #tpu.memory_space<vmem>>, vector<8x512xf32>,
    %c3_i32 = arith.constant 3 : i32
    %9 = arith.cmpi eq, %arg0, %c3_i32 : i32
    %10 = arith.extui %9 : i1 to i32
    %c0_i32_8 = arith.constant 0 : i32
    %11 = arith.cmpi ne, %10, %c0_i32_8 : i32
    scf.if %11 {
      %c0_9 = arith.constant 0 : index
      %c0_10 = arith.constant 0 : index
      %12 = vector.load %arg8[%c0_9, %c0_10] : memref<8x512xf32, #tpu.memory_space<vmem>>, vector<8x512xf32>
      %cst_11 = arith.constant dense<0.000000e+00> : vector<512xf32>
      %13 = vector.multi_reduction <add>, %12, %cst_11 [0] : vector<8x512xf32> to vector<512xf32>
      %14 = vector.shape_cast %13 : vector<512xf32> to vector<1x512xf32>
      %cst_12 = arith.constant 8.000000e+00 : f32
      %15 = vector.broadcast %cst_12 : f32 to vector<1x512xf32>
      %16 = arith.divf %14, %15 : vector<1x512xf32>
      %17 = vector.broadcast %16 : vector<1x512xf32> to vector<8x512xf32>
      %18 = arith.subf %12, %17 : vector<8x512xf32>
      %19 = arith.mulf %18, %18 : vector<8x512xf32>
      %cst_13 = arith.constant dense<0.000000e+00> : vector<512xf32>
      %20 = vector.multi_reduction <add>, %19, %cst_13 [0] : vector<8x512xf32> to vector<512xf32>
      %21 = vector.shape_cast %20 : vector<512xf32> to vector<1x512xf32>
      %cst_14 = arith.constant 8.000000e+00 : f32
      %22 = vector.broadcast %cst_14 : f32 to vector<1x512xf32>
      %23 = arith.divf %21, %22 : vector<1x512xf32>
      %cst_15 = arith.constant 9.99999974E-6 : f32
      %24 = vector.broadcast %cst_15 : f32 to vector<1x512xf32>
      %25 = arith.addf %23, %24 : vector<1x512xf32>
      %26 = math.rsqrt %25 : vector<1x512xf32>
      %27 = vector.broadcast %26 : vector<1x512xf32> to vector<8x512xf32>
      %28 = arith.mulf %18, %27 : vector<8x512xf32>
      %c0_16 = arith.constant 0 : index
      %c0_17 = arith.constant 0 : index
      %29 = vector.load %arg3[%c0_16, %c0_17] : memref<1x512xf32, #tpu.memory_space<vmem>>, vector<1x512xf32>
      %30 = vector.broadcast %29 : vector<1x512xf32> to vector<8x512xf32>
      %31 = arith.mulf %28, %30 : vector<8x512xf32>
      %c0_18 = arith.constant 0 : index
      %c0_19 = arith.constant 0 : index
      %32 = vector.load %arg4[%c0_18, %c0_19] : memref<1x512xf32, #tpu.memory_space<vmem>>, vector<1x512xf32>
      %33 = vector.broadcast %32 : vector<1x512xf32> to vector<8x512xf32>
      %34 = arith.addf %31, %33 : vector<8x512xf32>
      %cst_20 = arith.constant 0.000000e+00 : f32
      %35 = vector.broadcast %cst_20 : f32 to vector<8x512xf32>
      %36 = arith.maximumf %34, %35 : vector<8x512xf32>
      %c0_21 = arith.constant 0 : index
      %c0_22 = arith.constant 0 : index
      %37 = vector.load %arg5[%c0_21, %c0_22] : memref<512x128xf32, #tpu.memory_space<vmem>>, vector<512x128xf32>
      %cst_23 = arith.constant dense<0.000000e+00> : vector<8x128xf32>
      %38 = tpu.matmul %36, %37, %cst_23 {dimension_numbers = #tpu.dot_dimension_numbers<[1], [0], [0], [1], [0, 0, 1, 1], [], []>} : vector<8x512xf32>, vector<512x128xf32>, vector<8x128xf32> -> vector<8x128xf32>
      %c0_24 = arith.constant 0 : index
      %c0_25 = arith.constant 0 : index
      %39 = vector.load %arg6[%c0_24, %c0_25] : memref<1x128xf32, #tpu.memory_space<vmem>>, vector<1x128xf32>
      %40 = vector.broadcast %39 : vector<1x128xf32> to vector<8x128xf32>
      %41 = arith.addf %38, %40 : vector<8x128xf32>
      %42 = arith.mulf %41, %41 : vector<8x128xf32>
      %cst_26 = arith.constant dense<0.000000e+00> : vector<8xf32>
      %43 = vector.multi_reduction <add>, %42, %cst_26 [1] : vector<8x128xf32> to vector<8xf32>
      %44 = vector.shape_cast %43 : vector<8xf32> to vector<8x1xf32>
      %cst_27 = arith.constant 1.000000e-24 : f32
      %45 = vector.broadcast %cst_27 : f32 to vector<8x1xf32>
      %46 = arith.maximumf %44, %45 : vector<8x1xf32>
      %47 = math.rsqrt %46 : vector<8x1xf32>
      %48 = vector.broadcast %47 : vector<8x1xf32> to vector<8x128xf32>
      %49 = arith.mulf %41, %48 : vector<8x128xf32>
      %c0_28 = arith.constant 0 : index
      %c0_29 = arith.constant 0 : index
      %50 = vector.load %arg7[%c0_28, %c0_29] : memref<8x128xf32, #tpu.memory_space<vmem>>, vector<8x128xf32>
      tpu.vector_store %arg7[%c0_28, %c0_29], %49 {strides = array<i32>} : memref<8x128xf32, #tpu.memory_space<vmem>>, vector<8x128xf32>,
    } else {
    }
    return
  }
  func.func @transform_0(%arg0: i32) -> (i32, i32) {
    %c0_i32 = arith.constant 0 : i32
    %c0_i32_0 = arith.constant 0 : i32
    return %c0_i32, %arg0 : i32, i32
  }
  func.func @transform_1(%arg0: i32) -> (i32, i32) {
    %c0_i32 = arith.constant 0 : i32
    %c0_i32_0 = arith.constant 0 : i32
    return %arg0, %c0_i32 : i32, i32
  }
  func.func @transform_2(%arg0: i32) -> (i32, i32) {
    %c0_i32 = arith.constant 0 : i32
    %c0_i32_0 = arith.constant 0 : i32
    %c0_i32_1 = arith.constant 0 : i32
    return %c0_i32, %c0_i32_0 : i32, i32
  }
  func.func @transform_3(%arg0: i32) -> (i32, i32) {
    %c0_i32 = arith.constant 0 : i32
    %c0_i32_0 = arith.constant 0 : i32
    %c0_i32_1 = arith.constant 0 : i32
    return %c0_i32, %c0_i32_0 : i32, i32
  }
  func.func @transform_4(%arg0: i32) -> (i32, i32) {
    %c0_i32 = arith.constant 0 : i32
    %c0_i32_0 = arith.constant 0 : i32
    %c0_i32_1 = arith.constant 0 : i32
    return %c0_i32, %c0_i32_0 : i32, i32
  }
  func.func @transform_5(%arg0: i32) -> (i32, i32) {
    %c0_i32 = arith.constant 0 : i32
    %c0_i32_0 = arith.constant 0 : i32
    %c0_i32_1 = arith.constant 0 : i32
    return %c0_i32, %c0_i32_0 : i32, i32
  }
  func.func @transform_6(%arg0: i32) -> (i32, i32) {
    %c0_i32 = arith.constant 0 : i32
    %c0_i32_0 = arith.constant 0 : i32
    %c0_i32_1 = arith.constant 0 : i32
    return %c0_i32, %c0_i32_0 : i32, i32
  }
}

</mosaic_0001>

<llo_original>
// kernel: tpu_custom_call.1
$region0: #{tpu_custom_call.1}
  #allocation0 [shape = 'u32[]', space=smem, size = 0x4, offset = 0x4, fixed_abs, tag = 'smem constant byte address 0x4 - core index']
  #allocation1 [shape = 'u32[144,128]{1,0:T(1,128)}', space=vmem, size = 0x12000, scoped, tag = 'internal scratch']
  #allocation2 [shape = 'f32[8,512]{1,0:T(8,128)}', space=vmem, size = 0x4000, scoped, tag = 'scratch operand']
  %s0 = inlined_call_operand.hbm [shape: f32[8,2048], index: 0, kind: input, shape index: {}]
  %s1 = inlined_call_operand.hbm [shape: f32[2048,512], index: 1, kind: input, shape index: {}]
  %s2 = inlined_call_operand.hbm [shape: f32[1,512], index: 2, kind: input, shape index: {}]
  %s3 = inlined_call_operand.hbm [shape: f32[1,512], index: 3, kind: input, shape index: {}]
  %s4 = inlined_call_operand.hbm [shape: f32[512,128], index: 4, kind: input, shape index: {}]
  %s5 = inlined_call_operand.hbm [shape: f32[1,128], index: 5, kind: input, shape index: {}]
  %s6 = inlined_call_operand.hbm [shape: f32[8,128], index: 6, kind: output, shape index: {}]
  %s7 = sld [smem:[#allocation0]]
  $region89: #{tpu_custom_call.1} parent=0
    _
  %s9 = ssub.s32 1, %s7
  %s10 = scalar_select 0, %s9, %s7
  $region1: #{tpu_custom_call.1} parent=0
    #allocation3 [shape = 'u8[32768]{0}', space=vmem, size = 0x8000, scoped, tag = 'input window, operand 0']
    #allocation4 [shape = 's32[2]{0}', space=sflag, size = 0x8, scoped, tag = 'scoped memory for tpu_custom_call.1']
    #allocation5 [shape = 's32[2]{0}', space=sflag, size = 0x8, scoped, tag = 'scoped memory for tpu_custom_call.1']
    #allocation6 [shape = 'u8[2097152]{0}', space=vmem, size = 0x200000, scoped, tag = 'input window, operand 1']
    #allocation7 [shape = 's32[2]{0}', space=sflag, size = 0x8, scoped, tag = 'scoped memory for tpu_custom_call.1']
    #allocation8 [shape = 'u8[2048]{0}', space=vmem, size = 0x800, scoped, tag = 'input window, operand 2, single buffered']
    #allocation9 [shape = 'u8[2048]{0}', space=vmem, size = 0x800, scoped, tag = 'input window, operand 3, single buffered']
    #allocation10 [shape = 's32[1]{0}', space=sflag, size = 0x4, scoped, tag = 'scoped memory for tpu_custom_call.1']
    #allocation11 [shape = 'u8[262144]{0}', space=vmem, size = 0x40000, scoped, tag = 'input window, operand 4, single buffered']
    #allocation12 [shape = 'u8[512]{0}', space=vmem, size = 0x400, scoped, tag = 'input window, operand 5, single buffered']
    #allocation13 [shape = 's32[1]{0}', space=sflag, size = 0x4, scoped, tag = 'scoped memory for tpu_custom_call.1']
    #allocation14 [shape = 'u8[4096]{0}', space=vmem, size = 0x1000, scoped, tag = 'output window, operand 0, single buffered']
    %11 = vsyncpa [#allocation4], 0
    %s12 = scalar_lea.sflag [#allocation4], 1
    %13 = vsyncpa %s12, 0
    %14 = vsyncpa [#allocation7], 0
    %s15 = scalar_lea.sflag [#allocation7], 1
    %16 = vsyncpa %s15, 0
    %17 = vsyncpa [#allocation10], 0
    %18 = vsyncpa [#allocation13], 0
    %19 = vsyncpa [#allocation5], 0
    loop: start=0, step=1, limit=6
    $region2: #{tpu_custom_call.1} parent=1 // loop_pre_header
      _
    $region3: #{tpu_custom_call.1} parent=1 // loop_header
      %s21 = sphi 0, %s25
      %p22 = scmp.ge.s32.totalorder %s21, 6
      %s31 = sphi 0, %s33
      %s34 = sphi 0, %s31
      %s35 = sphi 0, %s34
      %s51 = sphi 0, %s35
      %s57 = sphi 0, %s59
      %s60 = sphi 0, %s57
      %s61 = sphi 0, %s60
      %s77 = sphi 0, %s61
      %s81 = sphi 0, %s81
      %s83 = sphi 0, %s81
      %s84 = sphi 0, %s83
      %s98 = sphi 0, %s84
      %s102 = sphi 0, %s102
      %s104 = sphi 0, %s102
      %s105 = sphi 0, %s104
      %s119 = sphi 0, %s105
      %s123 = sphi 0, %s123
      %s125 = sphi 0, %s123
      %s126 = sphi 0, %s125
      %s140 = sphi 0, %s126
      %s144 = sphi 0, %s144
      %s146 = sphi 0, %s144
      %s147 = sphi 0, %s146
      %s161 = sphi 0, %s147
      %s165 = sphi 0, %s165
      %s167 = sphi 0, %s165
      %s168 = sphi 0, %s167
      %s182 = sphi 0, %s168
    $region4: #{tpu_custom_call.1} parent=1 // loop_header_branch
      %24 = sbr.rel (%p22) target = $region8
    $region5: #{tpu_custom_call.1} parent=1 // loop_body
      %s26 = ssub.s32 %s21, 1
      %s27 = ssub.s32 %s21, 2
      %s28 = sadd.s32 %s21, 1
      %s29 = ssub.s32 %s21, %s28
      %p30 = scmp.eq.s32.totalorder %s29, 0
      %s32 = sadd.s32 %s31, 1
      %s33 = scalar_select %p30, %s31, %s32
      %p36 = pneg %p30
      %p37 = scmp.eq.s32.totalorder %s21, 3
      %p38 = por %p36, %p37
      %p39 = scmp.ne.s32.totalorder %s31, %s34
      %p40 = scmp.eq.s32.totalorder %s21, 0
      %p41 = por %p39, %p40
      %p42 = scmp.ne.s32.totalorder %s31, %s34
      %p43 = scmp.eq.s32.totalorder %s26, 3
      %p44 = por %p42, %p43
      %p45 = scmp.ne.s32.totalorder %s34, %s35
      %p46 = scmp.eq.s32.totalorder %s26, 0
      %p47 = por %p45, %p46
      %p48 = scmp.ne.s32.totalorder %s34, %s35
      %p49 = scmp.eq.s32.totalorder %s27, 3
      %p50 = por %p48, %p49
      %p52 = scmp.ne.s32.totalorder %s35, %s51
      %p53 = scmp.eq.s32.totalorder %s27, 0
      %p54 = por %p52, %p53
      %s55 = ssub.s32 %s21, %s28
      %p56 = scmp.eq.s32.totalorder %s55, 0
      %s58 = sadd.s32 %s57, 1
      %s59 = scalar_select %p56, %s57, %s58
      %p62 = pneg %p56
      %p63 = scmp.eq.s32.totalorder %s21, 3
      %p64 = por %p62, %p63
      %p65 = scmp.ne.s32.totalorder %s57, %s60
      %p66 = scmp.eq.s32.totalorder %s21, 0
      %p67 = por %p65, %p66
      %p68 = scmp.ne.s32.totalorder %s57, %s60
      %p69 = scmp.eq.s32.totalorder %s26, 3
      %p70 = por %p68, %p69
      %p71 = scmp.ne.s32.totalorder %s60, %s61
      %p72 = scmp.eq.s32.totalorder %s26, 0
      %p73 = por %p71, %p72
      %p74 = scmp.ne.s32.totalorder %s60, %s61
      %p75 = scmp.eq.s32.totalorder %s27, 3
      %p76 = por %p74, %p75
      %p78 = scmp.ne.s32.totalorder %s61, %s77
      %p79 = scmp.eq.s32.totalorder %s27, 0
      %p80 = por %p78, %p79
      %s82 = sadd.s32 %s81, 1
      %p85 = scmp.eq.s32.totalorder %s21, 3
      %p86 = scmp.ne.s32.totalorder %s81, %s83
      %p87 = scmp.eq.s32.totalorder %s21, 0
      %p88 = por %p86, %p87
      %p89 = scmp.ne.s32.totalorder %s81, %s83
      %p90 = scmp.eq.s32.totalorder %s26, 3
      %p91 = por %p89, %p90
      %p92 = scmp.ne.s32.totalorder %s83, %s84
      %p93 = scmp.eq.s32.totalorder %s26, 0
      %p94 = por %p92, %p93
      %p95 = scmp.ne.s32.totalorder %s83, %s84
      %p96 = scmp.eq.s32.totalorder %s27, 3
      %p97 = por %p95, %p96
      %p99 = scmp.ne.s32.totalorder %s84, %s98
      %p100 = scmp.eq.s32.totalorder %s27, 0
      %p101 = por %p99, %p100
      %s103 = sadd.s32 %s102, 1
      %p106 = scmp.eq.s32.totalorder %s21, 3
      %p107 = scmp.ne.s32.totalorder %s102, %s104
      %p108 = scmp.eq.s32.totalorder %s21, 0
      %p109 = por %p107, %p108
      %p110 = scmp.ne.s32.totalorder %s102, %s104
      %p111 = scmp.eq.s32.totalorder %s26, 3
      %p112 = por %p110, %p111
      %p113 = scmp.ne.s32.totalorder %s104, %s105
      %p114 = scmp.eq.s32.totalorder %s26, 0
      %p115 = por %p113, %p114
      %p116 = scmp.ne.s32.totalorder %s104, %s105
      %p117 = scmp.eq.s32.totalorder %s27, 3
      %p118 = por %p116, %p117
      %p120 = scmp.ne.s32.totalorder %s105, %s119
      %p121 = scmp.eq.s32.totalorder %s27, 0
      %p122 = por %p120, %p121
      %s124 = sadd.s32 %s123, 1
      %p127 = scmp.eq.s32.totalorder %s21, 3
      %p128 = scmp.ne.s32.totalorder %s123, %s125
      %p129 = scmp.eq.s32.totalorder %s21, 0
      %p130 = por %p128, %p129
      %p131 = scmp.ne.s32.totalorder %s123, %s125
      %p132 = scmp.eq.s32.totalorder %s26, 3
      %p133 = por %p131, %p132
      %p134 = scmp.ne.s32.totalorder %s125, %s126
      %p135 = scmp.eq.s32.totalorder %s26, 0
      %p136 = por %p134, %p135
      %p137 = scmp.ne.s32.totalorder %s125, %s126
      %p138 = scmp.eq.s32.totalorder %s27, 3
      %p139 = por %p137, %p138
      %p141 = scmp.ne.s32.totalorder %s126, %s140
      %p142 = scmp.eq.s32.totalorder %s27, 0
      %p143 = por %p141, %p142
      %s145 = sadd.s32 %s144, 1
      %p148 = scmp.eq.s32.totalorder %s21, 3
      %p149 = scmp.ne.s32.totalorder %s144, %s146
      %p150 = scmp.eq.s32.totalorder %s21, 0
      %p151 = por %p149, %p150
      %p152 = scmp.ne.s32.totalorder %s144, %s146
      %p153 = scmp.eq.s32.totalorder %s26, 3
      %p154 = por %p152, %p153
      %p155 = scmp.ne.s32.totalorder %s146, %s147
      %p156 = scmp.eq.s32.totalorder %s26, 0
      %p157 = por %p155, %p156
      %p158 = scmp.ne.s32.totalorder %s146, %s147
      %p159 = scmp.eq.s32.totalorder %s27, 3
      %p160 = por %p158, %p159
      %p162 = scmp.ne.s32.totalorder %s147, %s161
      %p163 = scmp.eq.s32.totalorder %s27, 0
      %p164 = por %p162, %p163
      %s166 = sadd.s32 %s165, 1
      %p169 = scmp.eq.s32.totalorder %s21, 3
      %p170 = scmp.ne.s32.totalorder %s165, %s167
      %p171 = scmp.eq.s32.totalorder %s21, 0
      %p172 = por %p170, %p171
      %p173 = scmp.ne.s32.totalorder %s165, %s167
      %p174 = scmp.eq.s32.totalorder %s26, 3
      %p175 = por %p173, %p174
      %p176 = scmp.ne.s32.totalorder %s167, %s168
      %p177 = scmp.eq.s32.totalorder %s26, 0
      %p178 = por %p176, %p177
      %p179 = scmp.ne.s32.totalorder %s167, %s168
      %p180 = scmp.eq.s32.totalorder %s27, 3
      %p181 = por %p179, %p180
      %p183 = scmp.ne.s32.totalorder %s168, %s182
      %p184 = scmp.eq.s32.totalorder %s27, 0
      %p185 = por %p183, %p184
      %p186 = scmp.le.s32.totalorder 1, %s21
      %p187 = scmp.lt.s32.totalorder %s21, 5
      %p188 = pnand %p186, %p187
      %p189 = pneg %p188
      // Predicated region
      $region9: #{tpu_custom_call.1} parent=5 // pred_check
        _
      $region10: #{tpu_custom_call.1} parent=5 // pred_check_branch
        %191 = sbr.rel (%p188) target = $region12
      $region11: #{tpu_custom_call.1} parent=5 // pred_region
        %s192 = ssub.s32 %s21, 1
        // Predicated region
        $region13: #{tpu_custom_call.1} parent=11 // pred_check
          %p193 = pneg %p94
        $region14: #{tpu_custom_call.1} parent=11 // pred_check_branch
          %195 = sbr.rel (%p193) target = $region16
        $region15: #{tpu_custom_call.1} parent=11 // pred_region
          %s197 = ssub.s32 64, 64
          %198 = vsyncadd [#allocation7], %s197
          %s200 = sshll.u32 [#allocation8], 4
          %s201 = int_to_ptr.vmem [resolvable:$true] %s200
          %203 = dma.hbm_to_vmem [thread:$0]  %s2, 64, %s201, [#allocation7]
        $region16: #{tpu_custom_call.1} parent=11 // pred_fallthru
          _
        // Predicated region
        $region17: #{tpu_custom_call.1} parent=11 // pred_check
          %p204 = pneg %p115
        $region18: #{tpu_custom_call.1} parent=11 // pred_check_branch
          %206 = sbr.rel (%p204) target = $region20
        $region19: #{tpu_custom_call.1} parent=11 // pred_region
          %s208 = ssub.s32 64, 64
          %209 = vsyncadd [#allocation10], %s208
          %s211 = sshll.u32 [#allocation9], 4
          %s212 = int_to_ptr.vmem [resolvable:$true] %s211
          %214 = dma.hbm_to_vmem [thread:$0]  %s3, 64, %s212, [#allocation10]
        $region20: #{tpu_custom_call.1} parent=11 // pred_fallthru
          _
        // Predicated region
        $region21: #{tpu_custom_call.1} parent=11 // pred_check
          %p215 = pneg %p136
        $region22: #{tpu_custom_call.1} parent=11 // pred_check_branch
          %217 = sbr.rel (%p215) target = $region24
        $region23: #{tpu_custom_call.1} parent=11 // pred_region
          %s219 = ssub.s32 8192, 8192
          %220 = vsyncadd [#allocation10], %s219
          %s221 = sshll.u32 [#allocation11], 4
          %s222 = int_to_ptr.vmem [resolvable:$true] %s221
          %227 = dma.hbm_to_vmem [thread:$0]  %s4, 8192, %s222, [#allocation10], 128, 128, 8
        $region24: #{tpu_custom_call.1} parent=11 // pred_fallthru
          _
        // Predicated region
        $region25: #{tpu_custom_call.1} parent=11 // pred_check
          %p228 = pneg %p157
        $region26: #{tpu_custom_call.1} parent=11 // pred_check_branch
          %230 = sbr.rel (%p228) target = $region28
        $region27: #{tpu_custom_call.1} parent=11 // pred_region
          %s232 = ssub.s32 16, 16
          %233 = vsyncadd [#allocation13], %s232
          %s235 = sshll.u32 [#allocation12], 4
          %s236 = int_to_ptr.vmem [resolvable:$true] %s235
          %238 = dma.hbm_to_vmem [thread:$0]  %s5, 16, %s236, [#allocation13]
        $region28: #{tpu_custom_call.1} parent=11 // pred_fallthru
          _
      $region12: #{tpu_custom_call.1} parent=5 // pred_fallthru
        _
      %p239 = scmp.lt.s32.totalorder %s21, 4
      // Predicated region
      $region29: #{tpu_custom_call.1} parent=5 // pred_check
        %p240 = pneg %p239
      $region30: #{tpu_custom_call.1} parent=5 // pred_check_branch
        %242 = sbr.rel (%p240) target = $region32
      $region31: #{tpu_custom_call.1} parent=5 // pred_region
        // Predicated region
        $region33: #{tpu_custom_call.1} parent=31 // pred_check
          %p243 = pneg %p41
        $region34: #{tpu_custom_call.1} parent=31 // pred_check_branch
          %245 = sbr.rel (%p243) target = $region36
        $region35: #{tpu_custom_call.1} parent=31 // pred_region
          %s246 = sand.u32 %s31, 1
          %s247 = scalar_lea.sflag [#allocation4], %s246
          %s248 = sand.u32 %s31, 1
          %s249 = smul.addr %s248, 32
          %s250 = scalar_lea.vmem [#allocation3], %s249
          %s251 = smul.u32 4, %s21
          %s253 = ssub.s32 512, 512
          %254 = vsyncadd %s247, %s253
          %s255 = smul.addr %s251, 128
          %s256 = scalar_lea.hbm %s0, %s255
          %s258 = sshll.u32 %s250, 4
          %s259 = int_to_ptr.vmem [resolvable:$true] %s258
          %261 = dma.hbm_to_vmem [thread:$0]  %s256, 512, %s259, %s247
        $region36: #{tpu_custom_call.1} parent=31 // pred_fallthru
          _
        // Predicated region
        $region37: #{tpu_custom_call.1} parent=31 // pred_check
          %p262 = pneg %p67
        $region38: #{tpu_custom_call.1} parent=31 // pred_check_branch
          %264 = sbr.rel (%p262) target = $region40
        $region39: #{tpu_custom_call.1} parent=31 // pred_region
          %s265 = sand.u32 %s21, 1
          %s266 = scalar_lea.sflag [#allocation7], %s265
          %s267 = sand.u32 %s57, 1
          %s268 = smul.addr %s267, 2048
          %s269 = scalar_lea.vmem [#allocation6], %s268
          %s270 = smul.u32 64, %s21
          %s272 = ssub.s32 32768, 32768
          %273 = vsyncadd %s266, %s272
          %s274 = smul.addr %s270, 4
          %s275 = smul.addr %s274, 128
          %s276 = scalar_lea.hbm %s1, %s275
          %s277 = sshll.u32 %s269, 4
          %s278 = int_to_ptr.vmem [resolvable:$true] %s277
          %283 = dma.hbm_to_vmem [thread:$0]  %s276, 32768, %s278, %s266, 512, 512, 32
        $region40: #{tpu_custom_call.1} parent=31 // pred_fallthru
          _
      $region32: #{tpu_custom_call.1} parent=5 // pred_fallthru
        _
      %p284 = scmp.le.s32.totalorder 1, %s21
      %p285 = scmp.lt.s32.totalorder %s21, 5
      %p286 = pnand %p284, %p285
      %p287 = pneg %p286
      // Predicated region
      $region41: #{tpu_custom_call.1} parent=5 // pred_check
        _
      $region42: #{tpu_custom_call.1} parent=5 // pred_check_branch
        %289 = sbr.rel (%p286) target = $region44
      $region43: #{tpu_custom_call.1} parent=5 // pred_region
        %s290 = ssub.s32 %s21, 1
        %s291 = sand.u32 %s34, 1
        %s292 = scalar_lea.sflag [#allocation4], %s291
        %s293 = sand.u32 %s34, 1
        %s294 = smul.addr %s293, 32
        %s295 = scalar_lea.vmem [#allocation3], %s294
        // Predicated region
        $region45: #{tpu_custom_call.1} parent=43 // pred_check
          %p296 = pneg %p47
        $region46: #{tpu_custom_call.1} parent=43 // pred_check_branch
          %298 = sbr.rel (%p296) target = $region48
        $region47: #{tpu_custom_call.1} parent=43 // pred_region
          %299 = dma.done %s292, 512
        $region48: #{tpu_custom_call.1} parent=43 // pred_fallthru
          _
        %s300 = sand.u32 %s26, 1
        %s301 = scalar_lea.sflag [#allocation7], %s300
        %s302 = sand.u32 %s60, 1
        %s303 = smul.addr %s302, 2048
        %s304 = scalar_lea.vmem [#allocation6], %s303
        // Predicated region
        $region49: #{tpu_custom_call.1} parent=43 // pred_check
          %p305 = pneg %p73
        $region50: #{tpu_custom_call.1} parent=43 // pred_check_branch
          %307 = sbr.rel (%p305) target = $region52
        $region51: #{tpu_custom_call.1} parent=43 // pred_region
          %308 = dma.done %s301, 32768
        $region52: #{tpu_custom_call.1} parent=43 // pred_fallthru
          _
        // Predicated region
        $region53: #{tpu_custom_call.1} parent=43 // pred_check
          %p309 = pneg %p94
        $region54: #{tpu_custom_call.1} parent=43 // pred_check_branch
          %311 = sbr.rel (%p309) target = $region56
        $region55: #{tpu_custom_call.1} parent=43 // pred_region
          %312 = dma.done [#allocation7], 64
        $region56: #{tpu_custom_call.1} parent=43 // pred_fallthru
          _
        // Predicated region
        $region57: #{tpu_custom_call.1} parent=43 // pred_check
          %p313 = pneg %p115
        $region58: #{tpu_custom_call.1} parent=43 // pred_check_branch
          %315 = sbr.rel (%p313) target = $region60
        $region59: #{tpu_custom_call.1} parent=43 // pred_region
          %316 = dma.done [#allocation10], 64
        $region60: #{tpu_custom_call.1} parent=43 // pred_fallthru
          _
        // Predicated region
        $region61: #{tpu_custom_call.1} parent=43 // pred_check
          %p317 = pneg %p136
        $region62: #{tpu_custom_call.1} parent=43 // pred_check_branch
          %319 = sbr.rel (%p317) target = $region64
        $region63: #{tpu_custom_call.1} parent=43 // pred_region
          %320 = dma.done [#allocation10], 8192
        $region64: #{tpu_custom_call.1} parent=43 // pred_fallthru
          _
        // Predicated region
        $region65: #{tpu_custom_call.1} parent=43 // pred_check
          %p321 = pneg %p157
        $region66: #{tpu_custom_call.1} parent=43 // pred_check_branch
          %323 = sbr.rel (%p321) target = $region68
        $region67: #{tpu_custom_call.1} parent=43 // pred_region
          %324 = dma.done [#allocation13], 16
        $region68: #{tpu_custom_call.1} parent=43 // pred_fallthru
          _
        %s325 = sand.u32 %s34, 1
        %s326 = scalar_lea.sflag [#allocation4], %s325
        %s327 = sand.u32 %s34, 1
        %s328 = smul.addr %s327, 32
        %s329 = scalar_lea.vmem [#allocation3], %s328
        %p330 = pneg %p47
        %p331 = pneg %p44
        %s332 = sand.u32 %s26, 1
        %s333 = scalar_lea.sflag [#allocation7], %s332
        %s334 = sand.u32 %s60, 1
        %s335 = smul.addr %s334, 2048
        %s336 = scalar_lea.vmem [#allocation6], %s335
        %p337 = pneg %p73
        %p338 = pneg %p70
        %p339 = pneg %p94
        %p340 = pneg %p91
        %p341 = pneg %p115
        %p342 = pneg %p112
        %p343 = pneg %p136
        %p344 = pneg %p133
        %p345 = pneg %p157
        %p346 = pneg %p154
        %p347 = pneg %p178
        %p348 = pneg %p175
        %s349 = smul.u32 4, %s26
        %s350 = smul.u32 64, %s26
        %p351 = scmp.eq.s32.totalorder %s26, 0
        // Predicated region
        $region69: #{tpu_custom_call.1} parent=43 // pred_check
          %p352 = pneg %p351
        $region70: #{tpu_custom_call.1} parent=43 // pred_check_branch
          %354 = sbr.rel (%p352) target = $region72
        $region71: #{tpu_custom_call.1} parent=43 // pred_region
          %355 = vst [vmem:[#allocation2] sm:$0xff] 0.0
          %356 = vst [vmem:[#allocation2 + $0x8] sm:$0xff] 0.0
          %357 = vst [vmem:[#allocation2 + $0x10] sm:$0xff] 0.0
          %358 = vst [vmem:[#allocation2 + $0x18] sm:$0xff] 0.0
        $region72: #{tpu_custom_call.1} parent=43 // pred_fallthru
          _
        %v359 = vld [vmem:[#allocation2] sm:$0xff]
        %v360 = vld [vmem:[#allocation2 + $0x8] sm:$0xff]
        %v361 = vld [vmem:[#allocation2 + $0x10] sm:$0xff]
        %v362 = vld [vmem:[#allocation2 + $0x18] sm:$0xff]
        %v363 = vld [vmem:[%s295] sm:$0xff]
        %v364 = vld [vmem:[%s295 + $0x8] sm:$0xff]
        %v365 = vld [vmem:[%s295 + $0x10] sm:$0xff]
        %v366 = vld [vmem:[%s295 + $0x18] sm:$0xff]
        %v367 = vld [vmem:[%s304] sm:$0xff]
        %v368 = vld [vmem:[%s304 + $0x8] sm:$0xff]
        %v369 = vld [vmem:[%s304 + $0x10] sm:$0xff]
        %v370 = vld [vmem:[%s304 + $0x18] sm:$0xff]
        %v371 = vld [vmem:[%s304 + $0x20] sm:$0xff]
        %v372 = vld [vmem:[%s304 + $0x28] sm:$0xff]
        %v373 = vld [vmem:[%s304 + $0x30] sm:$0xff]
        %v374 = vld [vmem:[%s304 + $0x38] sm:$0xff]
        %v375 = vld [vmem:[%s304 + $0x40] sm:$0xff]
        %v376 = vld [vmem:[%s304 + $0x48] sm:$0xff]
        %v377 = vld [vmem:[%s304 + $0x50] sm:$0xff]
        %v378 = vld [vmem:[%s304 + $0x58] sm:$0xff]
        %v379 = vld [vmem:[%s304 + $0x60] sm:$0xff]
        %v380 = vld [vmem:[%s304 + $0x68] sm:$0xff]
        %v381 = vld [vmem:[%s304 + $0x70] sm:$0xff]
        %v382 = vld [vmem:[%s304 + $0x78] sm:$0xff]
        %v383 = vld [vmem:[%s304 + $0x80] sm:$0xff]
        %v384 = vld [vmem:[%s304 + $0x88] sm:$0xff]
        %v385 = vld [vmem:[%s304 + $0x90] sm:$0xff]
        %v386 = vld [vmem:[%s304 + $0x98] sm:$0xff]
        %v387 = vld [vmem:[%s304 + $0xa0] sm:$0xff]
        %v388 = vld [vmem:[%s304 + $0xa8] sm:$0xff]
        %v389 = vld [vmem:[%s304 + $0xb0] sm:$0xff]
        %v390 = vld [vmem:[%s304 + $0xb8] sm:$0xff]
        %v391 = vld [vmem:[%s304 + $0xc0] sm:$0xff]
        %v392 = vld [vmem:[%s304 + $0xc8] sm:$0xff]
        %v393 = vld [vmem:[%s304 + $0xd0] sm:$0xff]
        %v394 = vld [vmem:[%s304 + $0xd8] sm:$0xff]
        %v395 = vld [vmem:[%s304 + $0xe0] sm:$0xff]
        %v396 = vld [vmem:[%s304 + $0xe8] sm:$0xff]
        %v397 = vld [vmem:[%s304 + $0xf0] sm:$0xff]
        %v398 = vld [vmem:[%s304 + $0xf8] sm:$0xff]
        %v399 = vld [vmem:[%s304 + $0x100] sm:$0xff]
        %v400 = vld [vmem:[%s304 + $0x108] sm:$0xff]
        %v401 = vld [vmem:[%s304 + $0x110] sm:$0xff]
        %v402 = vld [vmem:[%s304 + $0x118] sm:$0xff]
        %v403 = vld [vmem:[%s304 + $0x120] sm:$0xff]
        %v404 = vld [vmem:[%s304 + $0x128] sm:$0xff]
        %v405 = vld [vmem:[%s304 + $0x130] sm:$0xff]
        %v406 = vld [vmem:[%s304 + $0x138] sm:$0xff]
        %v407 = vld [vmem:[%s304 + $0x140] sm:$0xff]
        %v408 = vld [vmem:[%s304 + $0x148] sm:$0xff]
        %v409 = vld [vmem:[%s304 + $0x150] sm:$0xff]
        %v410 = vld [vmem:[%s304 + $0x158] sm:$0xff]
        %v411 = vld [vmem:[%s304 + $0x160] sm:$0xff]
        %v412 = vld [vmem:[%s304 + $0x168] sm:$0xff]
        %v413 = vld [vmem:[%s304 + $0x170] sm:$0xff]
        %v414 = vld [vmem:[%s304 + $0x178] sm:$0xff]
        %v415 = vld [vmem:[%s304 + $0x180] sm:$0xff]
        %v416 = vld [vmem:[%s304 + $0x188] sm:$0xff]
        %v417 = vld [vmem:[%s304 + $0x190] sm:$0xff]
        %v418 = vld [vmem:[%s304 + $0x198] sm:$0xff]
        %v419 = vld [vmem:[%s304 + $0x1a0] sm:$0xff]
        %v420 = vld [vmem:[%s304 + $0x1a8] sm:$0xff]
        %v421 = vld [vmem:[%s304 + $0x1b0] sm:$0xff]
        %v422 = vld [vmem:[%s304 + $0x1b8] sm:$0xff]
        %v423 = vld [vmem:[%s304 + $0x1c0] sm:$0xff]
        %v424 = vld [vmem:[%s304 + $0x1c8] sm:$0xff]
        %v425 = vld [vmem:[%s304 + $0x1d0] sm:$0xff]
        %v426 = vld [vmem:[%s304 + $0x1d8] sm:$0xff]
        %v427 = vld [vmem:[%s304 + $0x1e0] sm:$0xff]
        %v428 = vld [vmem:[%s304 + $0x1e8] sm:$0xff]
        %v429 = vld [vmem:[%s304 + $0x1f0] sm:$0xff]
        %v430 = vld [vmem:[%s304 + $0x1f8] sm:$0xff]
        %v431 = vld [vmem:[%s304 + $0x200] sm:$0xff]
        %v432 = vld [vmem:[%s304 + $0x208] sm:$0xff]
        %v433 = vld [vmem:[%s304 + $0x210] sm:$0xff]
        %v434 = vld [vmem:[%s304 + $0x218] sm:$0xff]
        %v435 = vld [vmem:[%s304 + $0x220] sm:$0xff]
        %v436 = vld [vmem:[%s304 + $0x228] sm:$0xff]
        %v437 = vld [vmem:[%s304 + $0x230] sm:$0xff]
        %v438 = vld [vmem:[%s304 + $0x238] sm:$0xff]
        %v439 = vld [vmem:[%s304 + $0x240] sm:$0xff]
        %v440 = vld [vmem:[%s304 + $0x248] sm:$0xff]
        %v441 = vld [vmem:[%s304 + $0x250] sm:$0xff]
        %v442 = vld [vmem:[%s304 + $0x258] sm:$0xff]
        %v443 = vld [vmem:[%s304 + $0x260] sm:$0xff]
        %v444 = vld [vmem:[%s304 + $0x268] sm:$0xff]
        %v445 = vld [vmem:[%s304 + $0x270] sm:$0xff]
        %v446 = vld [vmem:[%s304 + $0x278] sm:$0xff]
        %v447 = vld [vmem:[%s304 + $0x280] sm:$0xff]
        %v448 = vld [vmem:[%s304 + $0x288] sm:$0xff]
        %v449 = vld [vmem:[%s304 + $0x290] sm:$0xff]
        %v450 = vld [vmem:[%s304 + $0x298] sm:$0xff]
        %v451 = vld [vmem:[%s304 + $0x2a0] sm:$0xff]
        %v452 = vld [vmem:[%s304 + $0x2a8] sm:$0xff]
        %v453 = vld [vmem:[%s304 + $0x2b0] sm:$0xff]
        %v454 = vld [vmem:[%s304 + $0x2b8] sm:$0xff]
        %v455 = vld [vmem:[%s304 + $0x2c0] sm:$0xff]
        %v456 = vld [vmem:[%s304 + $0x2c8] sm:$0xff]
        %v457 = vld [vmem:[%s304 + $0x2d0] sm:$0xff]
        %v458 = vld [vmem:[%s304 + $0x2d8] sm:$0xff]
        %v459 = vld [vmem:[%s304 + $0x2e0] sm:$0xff]
        %v460 = vld [vmem:[%s304 + $0x2e8] sm:$0xff]
        %v461 = vld [vmem:[%s304 + $0x2f0] sm:$0xff]
        %v462 = vld [vmem:[%s304 + $0x2f8] sm:$0xff]
        %v463 = vld [vmem:[%s304 + $0x300] sm:$0xff]
        %v464 = vld [vmem:[%s304 + $0x308] sm:$0xff]
        %v465 = vld [vmem:[%s304 + $0x310] sm:$0xff]
        %v466 = vld [vmem:[%s304 + $0x318] sm:$0xff]
        %v467 = vld [vmem:[%s304 + $0x320] sm:$0xff]
        %v468 = vld [vmem:[%s304 + $0x328] sm:$0xff]
        %v469 = vld [vmem:[%s304 + $0x330] sm:$0xff]
        %v470 = vld [vmem:[%s304 + $0x338] sm:$0xff]
        %v471 = vld [vmem:[%s304 + $0x340] sm:$0xff]
        %v472 = vld [vmem:[%s304 + $0x348] sm:$0xff]
        %v473 = vld [vmem:[%s304 + $0x350] sm:$0xff]
        %v474 = vld [vmem:[%s304 + $0x358] sm:$0xff]
        %v475 = vld [vmem:[%s304 + $0x360] sm:$0xff]
        %v476 = vld [vmem:[%s304 + $0x368] sm:$0xff]
        %v477 = vld [vmem:[%s304 + $0x370] sm:$0xff]
        %v478 = vld [vmem:[%s304 + $0x378] sm:$0xff]
        %v479 = vld [vmem:[%s304 + $0x380] sm:$0xff]
        %v480 = vld [vmem:[%s304 + $0x388] sm:$0xff]
        %v481 = vld [vmem:[%s304 + $0x390] sm:$0xff]
        %v482 = vld [vmem:[%s304 + $0x398] sm:$0xff]
        %v483 = vld [vmem:[%s304 + $0x3a0] sm:$0xff]
        %v484 = vld [vmem:[%s304 + $0x3a8] sm:$0xff]
        %v485 = vld [vmem:[%s304 + $0x3b0] sm:$0xff]
        %v486 = vld [vmem:[%s304 + $0x3b8] sm:$0xff]
        %v487 = vld [vmem:[%s304 + $0x3c0] sm:$0xff]
        %v488 = vld [vmem:[%s304 + $0x3c8] sm:$0xff]
        %v489 = vld [vmem:[%s304 + $0x3d0] sm:$0xff]
        %v490 = vld [vmem:[%s304 + $0x3d8] sm:$0xff]
        %v491 = vld [vmem:[%s304 + $0x3e0] sm:$0xff]
        %v492 = vld [vmem:[%s304 + $0x3e8] sm:$0xff]
        %v493 = vld [vmem:[%s304 + $0x3f0] sm:$0xff]
        %v494 = vld [vmem:[%s304 + $0x3f8] sm:$0xff]
        %v495 = vld [vmem:[%s304 + $0x400] sm:$0xff]
        %v496 = vld [vmem:[%s304 + $0x408] sm:$0xff]
        %v497 = vld [vmem:[%s304 + $0x410] sm:$0xff]
        %v498 = vld [vmem:[%s304 + $0x418] sm:$0xff]
        %v499 = vld [vmem:[%s304 + $0x420] sm:$0xff]
        %v500 = vld [vmem:[%s304 + $0x428] sm:$0xff]
        %v501 = vld [vmem:[%s304 + $0x430] sm:$0xff]
        %v502 = vld [vmem:[%s304 + $0x438] sm:$0xff]
        %v503 = vld [vmem:[%s304 + $0x440] sm:$0xff]
        %v504 = vld [vmem:[%s304 + $0x448] sm:$0xff]
        %v505 = vld [vmem:[%s304 + $0x450] sm:$0xff]
        %v506 = vld [vmem:[%s304 + $0x458] sm:$0xff]
        %v507 = vld [vmem:[%s304 + $0x460] sm:$0xff]
        %v508 = vld [vmem:[%s304 + $0x468] sm:$0xff]
        %v509 = vld [vmem:[%s304 + $0x470] sm:$0xff]
        %v510 = vld [vmem:[%s304 + $0x478] sm:$0xff]
        %v511 = vld [vmem:[%s304 + $0x480] sm:$0xff]
        %v512 = vld [vmem:[%s304 + $0x488] sm:$0xff]
        %v513 = vld [vmem:[%s304 + $0x490] sm:$0xff]
        %v514 = vld [vmem:[%s304 + $0x498] sm:$0xff]
        %v515 = vld [vmem:[%s304 + $0x4a0] sm:$0xff]
        %v516 = vld [vmem:[%s304 + $0x4a8] sm:$0xff]
        %v517 = vld [vmem:[%s304 + $0x4b0] sm:$0xff]
        %v518 = vld [vmem:[%s304 + $0x4b8] sm:$0xff]
        %v519 = vld [vmem:[%s304 + $0x4c0] sm:$0xff]
        %v520 = vld [vmem:[%s304 + $0x4c8] sm:$0xff]
        %v521 = vld [vmem:[%s304 + $0x4d0] sm:$0xff]
        %v522 = vld [vmem:[%s304 + $0x4d8] sm:$0xff]
        %v523 = vld [vmem:[%s304 + $0x4e0] sm:$0xff]
        %v524 = vld [vmem:[%s304 + $0x4e8] sm:$0xff]
        %v525 = vld [vmem:[%s304 + $0x4f0] sm:$0xff]
        %v526 = vld [vmem:[%s304 + $0x4f8] sm:$0xff]
        %v527 = vld [vmem:[%s304 + $0x500] sm:$0xff]
        %v528 = vld [vmem:[%s304 + $0x508] sm:$0xff]
        %v529 = vld [vmem:[%s304 + $0x510] sm:$0xff]
        %v530 = vld [vmem:[%s304 + $0x518] sm:$0xff]
        %v531 = vld [vmem:[%s304 + $0x520] sm:$0xff]
        %v532 = vld [vmem:[%s304 + $0x528] sm:$0xff]
        %v533 = vld [vmem:[%s304 + $0x530] sm:$0xff]
        %v534 = vld [vmem:[%s304 + $0x538] sm:$0xff]
        %v535 = vld [vmem:[%s304 + $0x540] sm:$0xff]
        %v536 = vld [vmem:[%s304 + $0x548] sm:$0xff]
        %v537 = vld [vmem:[%s304 + $0x550] sm:$0xff]
        %v538 = vld [vmem:[%s304 + $0x558] sm:$0xff]
        %v539 = vld [vmem:[%s304 + $0x560] sm:$0xff]
        %v540 = vld [vmem:[%s304 + $0x568] sm:$0xff]
        %v541 = vld [vmem:[%s304 + $0x570] sm:$0xff]
        %v542 = vld [vmem:[%s304 + $0x578] sm:$0xff]
        %v543 = vld [vmem:[%s304 + $0x580] sm:$0xff]
        %v544 = vld [vmem:[%s304 + $0x588] sm:$0xff]
        %v545 = vld [vmem:[%s304 + $0x590] sm:$0xff]
        %v546 = vld [vmem:[%s304 + $0x598] sm:$0xff]
        %v547 = vld [vmem:[%s304 + $0x5a0] sm:$0xff]
        %v548 = vld [vmem:[%s304 + $0x5a8] sm:$0xff]
        %v549 = vld [vmem:[%s304 + $0x5b0] sm:$0xff]
        %v550 = vld [vmem:[%s304 + $0x5b8] sm:$0xff]
        %v551 = vld [vmem:[%s304 + $0x5c0] sm:$0xff]
        %v552 = vld [vmem:[%s304 + $0x5c8] sm:$0xff]
        %v553 = vld [vmem:[%s304 + $0x5d0] sm:$0xff]
        %v554 = vld [vmem:[%s304 + $0x5d8] sm:$0xff]
        %v555 = vld [vmem:[%s304 + $0x5e0] sm:$0xff]
        %v556 = vld [vmem:[%s304 + $0x5e8] sm:$0xff]
        %v557 = vld [vmem:[%s304 + $0x5f0] sm:$0xff]
        %v558 = vld [vmem:[%s304 + $0x5f8] sm:$0xff]
        %v559 = vld [vmem:[%s304 + $0x600] sm:$0xff]
        %v560 = vld [vmem:[%s304 + $0x608] sm:$0xff]
        %v561 = vld [vmem:[%s304 + $0x610] sm:$0xff]
        %v562 = vld [vmem:[%s304 + $0x618] sm:$0xff]
        %v563 = vld [vmem:[%s304 + $0x620] sm:$0xff]
        %v564 = vld [vmem:[%s304 + $0x628] sm:$0xff]
        %v565 = vld [vmem:[%s304 + $0x630] sm:$0xff]
        %v566 = vld [vmem:[%s304 + $0x638] sm:$0xff]
        %v567 = vld [vmem:[%s304 + $0x640] sm:$0xff]
        %v568 = vld [vmem:[%s304 + $0x648] sm:$0xff]
        %v569 = vld [vmem:[%s304 + $0x650] sm:$0xff]
        %v570 = vld [vmem:[%s304 + $0x658] sm:$0xff]
        %v571 = vld [vmem:[%s304 + $0x660] sm:$0xff]
        %v572 = vld [vmem:[%s304 + $0x668] sm:$0xff]
        %v573 = vld [vmem:[%s304 + $0x670] sm:$0xff]
        %v574 = vld [vmem:[%s304 + $0x678] sm:$0xff]
        %v575 = vld [vmem:[%s304 + $0x680] sm:$0xff]
        %v576 = vld [vmem:[%s304 + $0x688] sm:$0xff]
        %v577 = vld [vmem:[%s304 + $0x690] sm:$0xff]
        %v578 = vld [vmem:[%s304 + $0x698] sm:$0xff]
        %v579 = vld [vmem:[%s304 + $0x6a0] sm:$0xff]
        %v580 = vld [vmem:[%s304 + $0x6a8] sm:$0xff]
        %v581 = vld [vmem:[%s304 + $0x6b0] sm:$0xff]
        %v582 = vld [vmem:[%s304 + $0x6b8] sm:$0xff]
        %v583 = vld [vmem:[%s304 + $0x6c0] sm:$0xff]
        %v584 = vld [vmem:[%s304 + $0x6c8] sm:$0xff]
        %v585 = vld [vmem:[%s304 + $0x6d0] sm:$0xff]
        %v586 = vld [vmem:[%s304 + $0x6d8] sm:$0xff]
        %v587 = vld [vmem:[%s304 + $0x6e0] sm:$0xff]
        %v588 = vld [vmem:[%s304 + $0x6e8] sm:$0xff]
        %v589 = vld [vmem:[%s304 + $0x6f0] sm:$0xff]
        %v590 = vld [vmem:[%s304 + $0x6f8] sm:$0xff]
        %v591 = vld [vmem:[%s304 + $0x700] sm:$0xff]
        %v592 = vld [vmem:[%s304 + $0x708] sm:$0xff]
        %v593 = vld [vmem:[%s304 + $0x710] sm:$0xff]
        %v594 = vld [vmem:[%s304 + $0x718] sm:$0xff]
        %v595 = vld [vmem:[%s304 + $0x720] sm:$0xff]
        %v596 = vld [vmem:[%s304 + $0x728] sm:$0xff]
        %v597 = vld [vmem:[%s304 + $0x730] sm:$0xff]
        %v598 = vld [vmem:[%s304 + $0x738] sm:$0xff]
        %v599 = vld [vmem:[%s304 + $0x740] sm:$0xff]
        %v600 = vld [vmem:[%s304 + $0x748] sm:$0xff]
        %v601 = vld [vmem:[%s304 + $0x750] sm:$0xff]
        %v602 = vld [vmem:[%s304 + $0x758] sm:$0xff]
        %v603 = vld [vmem:[%s304 + $0x760] sm:$0xff]
        %v604 = vld [vmem:[%s304 + $0x768] sm:$0xff]
        %v605 = vld [vmem:[%s304 + $0x770] sm:$0xff]
        %v606 = vld [vmem:[%s304 + $0x778] sm:$0xff]
        %v607 = vld [vmem:[%s304 + $0x780] sm:$0xff]
        %v608 = vld [vmem:[%s304 + $0x788] sm:$0xff]
        %v609 = vld [vmem:[%s304 + $0x790] sm:$0xff]
        %v610 = vld [vmem:[%s304 + $0x798] sm:$0xff]
        %v611 = vld [vmem:[%s304 + $0x7a0] sm:$0xff]
        %v612 = vld [vmem:[%s304 + $0x7a8] sm:$0xff]
        %v613 = vld [vmem:[%s304 + $0x7b0] sm:$0xff]
        %v614 = vld [vmem:[%s304 + $0x7b8] sm:$0xff]
        %v615 = vld [vmem:[%s304 + $0x7c0] sm:$0xff]
        %v616 = vld [vmem:[%s304 + $0x7c8] sm:$0xff]
        %v617 = vld [vmem:[%s304 + $0x7d0] sm:$0xff]
        %v618 = vld [vmem:[%s304 + $0x7d8] sm:$0xff]
        %v619 = vld [vmem:[%s304 + $0x7e0] sm:$0xff]
        %v620 = vld [vmem:[%s304 + $0x7e8] sm:$0xff]
        %v621 = vld [vmem:[%s304 + $0x7f0] sm:$0xff]
        %v622 = vld [vmem:[%s304 + $0x7f8] sm:$0xff]
        %623 = vmatprep.subr.mxu0 %v428
        %624 = vmatpush1.msra.mxu0 %v427
        %625 = vmatprep.subr.mxu0 %v424
        %626 = vmatpush1.msra.mxu0 %v423
        %627 = vmatprep.subr.mxu0 %v420
        %628 = vmatpush1.msra.mxu0 %v419
        %629 = vmatprep.subr.mxu0 %v416
        %630 = vmatpush1.msra.mxu0 %v415
        %631 = vmatprep.subr.mxu0 %v412
        %632 = vmatpush1.msra.mxu0 %v411
        %633 = vmatprep.subr.mxu0 %v408
        %634 = vmatpush1.msra.mxu0 %v407
        %635 = vmatprep.subr.mxu0 %v404
        %636 = vmatpush1.msra.mxu0 %v403
        %637 = vmatprep.subr.mxu0 %v400
        %638 = vmatpush1.msra.mxu0 %v399
        %639 = vmatprep.subr.mxu0 %v396
        %640 = vmatpush1.msra.mxu0 %v395
        %641 = vmatprep.subr.mxu0 %v392
        %642 = vmatpush1.msra.mxu0 %v391
        %643 = vmatprep.subr.mxu0 %v388
        %644 = vmatpush1.msra.mxu0 %v387
        %645 = vmatprep.subr.mxu0 %v384
        %646 = vmatpush1.msra.mxu0 %v383
        %647 = vmatprep.subr.mxu0 %v380
        %648 = vmatpush1.msra.mxu0 %v379
        %649 = vmatprep.subr.mxu0 %v376
        %650 = vmatpush1.msra.mxu0 %v375
        %651 = vmatprep.subr.mxu0 %v372
        %652 = vmatpush1.msra.mxu0 %v371
        %653 = vmatprep.subr.mxu0 %v368
        %654 = vmatpush1.msra.mxu0 %v367
        %655 = vmatprep.subr.mxu0 %v492
        %656 = vmatpush2.msra.mxu0 %v491
        %657 = vmatprep.subr.mxu0 %v488
        %658 = vmatpush2.msra.mxu0 %v487
        %659 = vmatprep.subr.mxu0 %v484
        %660 = vmatpush2.msra.mxu0 %v483
        %661 = vmatprep.subr.mxu0 %v480
        %662 = vmatpush2.msra.mxu0 %v479
        %663 = vmatprep.subr.mxu0 %v476
        %664 = vmatpush2.msra.mxu0 %v475
        %665 = vmatprep.subr.mxu0 %v472
        %666 = vmatpush2.msra.mxu0 %v471
        %667 = vmatprep.subr.mxu0 %v468
        %668 = vmatpush2.msra.mxu0 %v467
        %669 = vmatprep.subr.mxu0 %v464
        %670 = vmatpush2.msra.mxu0 %v463
        %671 = vmatprep.subr.mxu0 %v460
        %672 = vmatpush2.msra.mxu0 %v459
        %673 = vmatprep.subr.mxu0 %v456
        %674 = vmatpush2.msra.mxu0 %v455
        %675 = vmatprep.subr.mxu0 %v452
        %676 = vmatpush2.msra.mxu0 %v451
        %677 = vmatprep.subr.mxu0 %v448
        %678 = vmatpush2.msra.mxu0 %v447
        %679 = vmatprep.subr.mxu0 %v444
        %680 = vmatpush2.msra.mxu0 %v443
        %681 = vmatprep.subr.mxu0 %v440
        %682 = vmatpush2.msra.mxu0 %v439
        %683 = vmatprep.subr.mxu0 %v436
        %684 = vmatpush2.msra.mxu0 %v435
        %685 = vmatprep.subr.mxu0 %v432
        %686 = vmatpush2.msra.mxu0 %v431
        %687 = vmatprep.mubr.f32.mxu0 %v364
        %688 = vmatmul.mubr.f32.gmra.mxu0 %v363
        %v689 = vpop.f32.mrf.mxu0
        %v690 = vadd.f32 0.0, %v689
        %v691 = vpop.f32.mrf.mxu0
        %v692 = vadd.f32 0.0, %v691
        %693 = vdwg.mxu0
        %694 = vmatprep.subr.mxu0 %v556
        %695 = vmatpush1.msra.mxu0 %v555
        %696 = vmatprep.subr.mxu0 %v552
        %697 = vmatpush1.msra.mxu0 %v551
        %698 = vmatprep.subr.mxu0 %v548
        %699 = vmatpush1.msra.mxu0 %v547
        %700 = vmatprep.subr.mxu0 %v544
        %701 = vmatpush1.msra.mxu0 %v543
        %702 = vmatprep.subr.mxu0 %v540
        %703 = vmatpush1.msra.mxu0 %v539
        %704 = vmatprep.subr.mxu0 %v536
        %705 = vmatpush1.msra.mxu0 %v535
        %706 = vmatprep.subr.mxu0 %v532
        %707 = vmatpush1.msra.mxu0 %v531
        %708 = vmatprep.subr.mxu0 %v528
        %709 = vmatpush1.msra.mxu0 %v527
        %710 = vmatprep.subr.mxu0 %v524
        %711 = vmatpush1.msra.mxu0 %v523
        %712 = vmatprep.subr.mxu0 %v520
        %713 = vmatpush1.msra.mxu0 %v519
        %714 = vmatprep.subr.mxu0 %v516
        %715 = vmatpush1.msra.mxu0 %v515
        %716 = vmatprep.subr.mxu0 %v512
        %717 = vmatpush1.msra.mxu0 %v511
        %718 = vmatprep.subr.mxu0 %v508
        %719 = vmatpush1.msra.mxu0 %v507
        %720 = vmatprep.subr.mxu0 %v504
        %721 = vmatpush1.msra.mxu0 %v503
        %722 = vmatprep.subr.mxu0 %v500
        %723 = vmatpush1.msra.mxu0 %v499
        %724 = vmatprep.subr.mxu0 %v496
        %725 = vmatpush1.msra.mxu0 %v495
        %726 = vmatprep.subr.mxu0 %v620
        %727 = vmatpush2.msra.mxu0 %v619
        %728 = vmatprep.subr.mxu0 %v616
        %729 = vmatpush2.msra.mxu0 %v615
        %730 = vmatprep.subr.mxu0 %v612
        %731 = vmatpush2.msra.mxu0 %v611
        %732 = vmatprep.subr.mxu0 %v608
        %733 = vmatpush2.msra.mxu0 %v607
        %734 = vmatprep.subr.mxu0 %v604
        %735 = vmatpush2.msra.mxu0 %v603
        %736 = vmatprep.subr.mxu0 %v600
        %737 = vmatpush2.msra.mxu0 %v599
        %738 = vmatprep.subr.mxu0 %v596
        %739 = vmatpush2.msra.mxu0 %v595
        %740 = vmatprep.subr.mxu0 %v592
        %741 = vmatpush2.msra.mxu0 %v591
        %742 = vmatprep.subr.mxu0 %v588
        %743 = vmatpush2.msra.mxu0 %v587
        %744 = vmatprep.subr.mxu0 %v584
        %745 = vmatpush2.msra.mxu0 %v583
        %746 = vmatprep.subr.mxu0 %v580
        %747 = vmatpush2.msra.mxu0 %v579
        %748 = vmatprep.subr.mxu0 %v576
        %749 = vmatpush2.msra.mxu0 %v575
        %750 = vmatprep.subr.mxu0 %v572
        %751 = vmatpush2.msra.mxu0 %v571
        %752 = vmatprep.subr.mxu0 %v568
        %753 = vmatpush2.msra.mxu0 %v567
        %754 = vmatprep.subr.mxu0 %v564
        %755 = vmatpush2.msra.mxu0 %v563
        %756 = vmatprep.subr.mxu0 %v560
        %757 = vmatpush2.msra.mxu0 %v559
        %758 = vmatprep.mubr.f32.mxu0 %v366
        %759 = vmatmul.mubr.f32.gmra.mxu0 %v365
        %v760 = vpop.f32.mrf.mxu0
        %v761 = vadd.f32 %v690, %v760
        %v762 = vpop.f32.mrf.mxu0
        %v763 = vadd.f32 %v692, %v762
        %764 = vdwg.mxu0
        %765 = vmatprep.subr.mxu0 %v430
        %766 = vmatpush1.msra.mxu0 %v429
        %767 = vmatprep.subr.mxu0 %v426
        %768 = vmatpush1.msra.mxu0 %v425
        %769 = vmatprep.subr.mxu0 %v422
        %770 = vmatpush1.msra.mxu0 %v421
        %771 = vmatprep.subr.mxu0 %v418
        %772 = vmatpush1.msra.mxu0 %v417
        %773 = vmatprep.subr.mxu0 %v414
        %774 = vmatpush1.msra.mxu0 %v413
        %775 = vmatprep.subr.mxu0 %v410
        %776 = vmatpush1.msra.mxu0 %v409
        %777 = vmatprep.subr.mxu0 %v406
        %778 = vmatpush1.msra.mxu0 %v405
        %779 = vmatprep.subr.mxu0 %v402
        %780 = vmatpush1.msra.mxu0 %v401
        %781 = vmatprep.subr.mxu0 %v398
        %782 = vmatpush1.msra.mxu0 %v397
        %783 = vmatprep.subr.mxu0 %v394
        %784 = vmatpush1.msra.mxu0 %v393
        %785 = vmatprep.subr.mxu0 %v390
        %786 = vmatpush1.msra.mxu0 %v389
        %787 = vmatprep.subr.mxu0 %v386
        %788 = vmatpush1.msra.mxu0 %v385
        %789 = vmatprep.subr.mxu0 %v382
        %790 = vmatpush1.msra.mxu0 %v381
        %791 = vmatprep.subr.mxu0 %v378
        %792 = vmatpush1.msra.mxu0 %v377
        %793 = vmatprep.subr.mxu0 %v374
        %794 = vmatpush1.msra.mxu0 %v373
        %795 = vmatprep.subr.mxu0 %v370
        %796 = vmatpush1.msra.mxu0 %v369
        %797 = vmatprep.subr.mxu0 %v494
        %798 = vmatpush2.msra.mxu0 %v493
        %799 = vmatprep.subr.mxu0 %v490
        %800 = vmatpush2.msra.mxu0 %v489
        %801 = vmatprep.subr.mxu0 %v486
        %802 = vmatpush2.msra.mxu0 %v485
        %803 = vmatprep.subr.mxu0 %v482
        %804 = vmatpush2.msra.mxu0 %v481
        %805 = vmatprep.subr.mxu0 %v478
        %806 = vmatpush2.msra.mxu0 %v477
        %807 = vmatprep.subr.mxu0 %v474
        %808 = vmatpush2.msra.mxu0 %v473
        %809 = vmatprep.subr.mxu0 %v470
        %810 = vmatpush2.msra.mxu0 %v469
        %811 = vmatprep.subr.mxu0 %v466
        %812 = vmatpush2.msra.mxu0 %v465
        %813 = vmatprep.subr.mxu0 %v462
        %814 = vmatpush2.msra.mxu0 %v461
        %815 = vmatprep.subr.mxu0 %v458
        %816 = vmatpush2.msra.mxu0 %v457
        %817 = vmatprep.subr.mxu0 %v454
        %818 = vmatpush2.msra.mxu0 %v453
        %819 = vmatprep.subr.mxu0 %v450
        %820 = vmatpush2.msra.mxu0 %v449
        %821 = vmatprep.subr.mxu0 %v446
        %822 = vmatpush2.msra.mxu0 %v445
        %823 = vmatprep.subr.mxu0 %v442
        %824 = vmatpush2.msra.mxu0 %v441
        %825 = vmatprep.subr.mxu0 %v438
        %826 = vmatpush2.msra.mxu0 %v437
        %827 = vmatprep.subr.mxu0 %v434
        %828 = vmatpush2.msra.mxu0 %v433
        %829 = vmatprep.mubr.f32.mxu0 %v364
        %830 = vmatmul.mubr.f32.gmra.mxu0 %v363
        %v831 = vpop.f32.mrf.mxu0
        %v832 = vadd.f32 0.0, %v831
        %v833 = vpop.f32.mrf.mxu0
        %v834 = vadd.f32 0.0, %v833
        %835 = vdwg.mxu0
        %836 = vmatprep.subr.mxu0 %v558
        %837 = vmatpush1.msra.mxu0 %v557
        %838 = vmatprep.subr.mxu0 %v554
        %839 = vmatpush1.msra.mxu0 %v553
        %840 = vmatprep.subr.mxu0 %v550
        %841 = vmatpush1.msra.mxu0 %v549
        %842 = vmatprep.subr.mxu0 %v546
        %843 = vmatpush1.msra.mxu0 %v545
        %844 = vmatprep.subr.mxu0 %v542
        %845 = vmatpush1.msra.mxu0 %v541
        %846 = vmatprep.subr.mxu0 %v538
        %847 = vmatpush1.msra.mxu0 %v537
        %848 = vmatprep.subr.mxu0 %v534
        %849 = vmatpush1.msra.mxu0 %v533
        %850 = vmatprep.subr.mxu0 %v530
        %851 = vmatpush1.msra.mxu0 %v529
        %852 = vmatprep.subr.mxu0 %v526
        %853 = vmatpush1.msra.mxu0 %v525
        %854 = vmatprep.subr.mxu0 %v522
        %855 = vmatpush1.msra.mxu0 %v521
        %856 = vmatprep.subr.mxu0 %v518
        %857 = vmatpush1.msra.mxu0 %v517
        %858 = vmatprep.subr.mxu0 %v514
        %859 = vmatpush1.msra.mxu0 %v513
        %860 = vmatprep.subr.mxu0 %v510
        %861 = vmatpush1.msra.mxu0 %v509
        %862 = vmatprep.subr.mxu0 %v506
        %863 = vmatpush1.msra.mxu0 %v505
        %864 = vmatprep.subr.mxu0 %v502
        %865 = vmatpush1.msra.mxu0 %v501
        %866 = vmatprep.subr.mxu0 %v498
        %867 = vmatpush1.msra.mxu0 %v497
        %868 = vmatprep.subr.mxu0 %v622
        %869 = vmatpush2.msra.mxu0 %v621
        %870 = vmatprep.subr.mxu0 %v618
        %871 = vmatpush2.msra.mxu0 %v617
        %872 = vmatprep.subr.mxu0 %v614
        %873 = vmatpush2.msra.mxu0 %v613
        %874 = vmatprep.subr.mxu0 %v610
        %875 = vmatpush2.msra.mxu0 %v609
        %876 = vmatprep.subr.mxu0 %v606
        %877 = vmatpush2.msra.mxu0 %v605
        %878 = vmatprep.subr.mxu0 %v602
        %879 = vmatpush2.msra.mxu0 %v601
        %880 = vmatprep.subr.mxu0 %v598
        %881 = vmatpush2.msra.mxu0 %v597
        %882 = vmatprep.subr.mxu0 %v594
        %883 = vmatpush2.msra.mxu0 %v593
        %884 = vmatprep.subr.mxu0 %v590
        %885 = vmatpush2.msra.mxu0 %v589
        %886 = vmatprep.subr.mxu0 %v586
        %887 = vmatpush2.msra.mxu0 %v585
        %888 = vmatprep.subr.mxu0 %v582
        %889 = vmatpush2.msra.mxu0 %v581
        %890 = vmatprep.subr.mxu0 %v578
        %891 = vmatpush2.msra.mxu0 %v577
        %892 = vmatprep.subr.mxu0 %v574
        %893 = vmatpush2.msra.mxu0 %v573
        %894 = vmatprep.subr.mxu0 %v570
        %895 = vmatpush2.msra.mxu0 %v569
        %896 = vmatprep.subr.mxu0 %v566
        %897 = vmatpush2.msra.mxu0 %v565
        %898 = vmatprep.subr.mxu0 %v562
        %899 = vmatpush2.msra.mxu0 %v561
        %900 = vmatprep.mubr.f32.mxu0 %v366
        %901 = vmatmul.mubr.f32.gmra.mxu0 %v365
        %v902 = vpop.f32.mrf.mxu0
        %v903 = vadd.f32 %v832, %v902
        %v904 = vpop.f32.mrf.mxu0
        %v905 = vadd.f32 %v834, %v904
        %906 = vdwg.mxu0
        %v907 = vadd.f32 %v359, %v761
        %v908 = vadd.f32 %v360, %v763
        %v909 = vadd.f32 %v361, %v903
        %v910 = vadd.f32 %v362, %v905
        %911 = vst [vmem:[#allocation2] sm:$0xff] %v907
        %912 = vst [vmem:[#allocation2 + $0x8] sm:$0xff] %v908
        %913 = vst [vmem:[#allocation2 + $0x10] sm:$0xff] %v909
        %914 = vst [vmem:[#allocation2 + $0x18] sm:$0xff] %v910
        %p915 = scmp.eq.s32.totalorder %s26, 3
        // Predicated region
        $region73: #{tpu_custom_call.1} parent=43 // pred_check
          %p916 = pneg %p915
        $region74: #{tpu_custom_call.1} parent=43 // pred_check_branch
          %918 = sbr.rel (%p916) target = $region76
        $region75: #{tpu_custom_call.1} parent=43 // pred_region
          %v919 = vld [vmem:[#allocation2] sm:$0xff]
          %v920 = vld [vmem:[#allocation2 + $0x8] sm:$0xff]
          %v921 = vld [vmem:[#allocation2 + $0x10] sm:$0xff]
          %v922 = vld [vmem:[#allocation2 + $0x18] sm:$0xff]
          %v923 = vrot.slane %v919, 4
          %v924 = vadd.f32 %v919, %v923
          %v925 = vrot.slane %v924, 2
          %v926 = vadd.f32 %v924, %v925
          %v927 = vrot.slane %v926, 1
          %v928 = vadd.f32 %v926, %v927
          %v929 = vrot.slane %v920, 4
          %v930 = vadd.f32 %v920, %v929
          %v931 = vrot.slane %v930, 2
          %v932 = vadd.f32 %v930, %v931
          %v933 = vrot.slane %v932, 1
          %v934 = vadd.f32 %v932, %v933
          %v935 = vrot.slane %v921, 4
          %v936 = vadd.f32 %v921, %v935
          %v937 = vrot.slane %v936, 2
          %v938 = vadd.f32 %v936, %v937
          %v939 = vrot.slane %v938, 1
          %v940 = vadd.f32 %v938, %v939
          %v941 = vrot.slane %v922, 4
          %v942 = vadd.f32 %v922, %v941
          %v943 = vrot.slane %v942, 2
          %v944 = vadd.f32 %v942, %v943
          %v945 = vrot.slane %v944, 1
          %v946 = vadd.f32 %v944, %v945
          %v947 = vrcp.pop 8.0
          %v948 = vmul.f32 %v928, %v947
          %v949 = vmul.f32 %v934, %v947
          %v950 = vmul.f32 %v940, %v947
          %v951 = vmul.f32 %v946, %v947
          %v952 = vsub.f32 %v919, %v948
          %v953 = vsub.f32 %v920, %v949
          %v954 = vsub.f32 %v921, %v950
          %v955 = vsub.f32 %v922, %v951
          %v956 = vmul.f32 %v952, %v952
          %v957 = vmul.f32 %v953, %v953
          %v958 = vmul.f32 %v954, %v954
          %v959 = vmul.f32 %v955, %v955
          %v960 = vrot.slane %v956, 4
          %v961 = vadd.f32 %v956, %v960
          %v962 = vrot.slane %v961, 2
          %v963 = vadd.f32 %v961, %v962
          %v964 = vrot.slane %v963, 1
          %v965 = vadd.f32 %v963, %v964
          %v966 = vrot.slane %v957, 4
          %v967 = vadd.f32 %v957, %v966
          %v968 = vrot.slane %v967, 2
          %v969 = vadd.f32 %v967, %v968
          %v970 = vrot.slane %v969, 1
          %v971 = vadd.f32 %v969, %v970
          %v972 = vrot.slane %v958, 4
          %v973 = vadd.f32 %v958, %v972
          %v974 = vrot.slane %v973, 2
          %v975 = vadd.f32 %v973, %v974
          %v976 = vrot.slane %v975, 1
          %v977 = vadd.f32 %v975, %v976
          %v978 = vrot.slane %v959, 4
          %v979 = vadd.f32 %v959, %v978
          %v980 = vrot.slane %v979, 2
          %v981 = vadd.f32 %v979, %v980
          %v982 = vrot.slane %v981, 1
          %v983 = vadd.f32 %v981, %v982
          %v984 = vmul.f32 %v965, %v947
          %v985 = vmul.f32 %v971, %v947
          %v986 = vmul.f32 %v977, %v947
          %v987 = vmul.f32 %v983, %v947
          %v988 = vadd.f32 %v984, 1e-05
          %v989 = vadd.f32 %v985, 1e-05
          %v990 = vadd.f32 %v986, 1e-05
          %v991 = vadd.f32 %v987, 1e-05
          %v992 = vrsqrt.pop %v988
          %v993 = vrsqrt.pop %v989
          %v994 = vrsqrt.pop %v990
          %v995 = vrsqrt.pop %v991
          %v996 = vmul.f32 %v952, %v992
          %v997 = vmul.f32 %v953, %v993
          %v998 = vmul.f32 %v954, %v994
          %v999 = vmul.f32 %v955, %v995
          %v1000 = vld [vmem:[#allocation8] sm:$0xf]
          %v1002 = vlaneseq
          %v1003 = vshrl.u32 %v1002, 7
          %v1004 = vsub.s32 0, %v1003
          %v1005 = vrot.slane %v1000, %v1004
          %v1006 = vlaneseq
          %v1007 = vshrl.u32 %v1006, 7
          %v1008 = vsub.s32 1, %v1007
          %v1009 = vrot.slane %v1000, %v1008
          %v1010 = vlaneseq
          %v1011 = vshrl.u32 %v1010, 7
          %v1012 = vsub.s32 2, %v1011
          %v1013 = vrot.slane %v1000, %v1012
          %v1014 = vlaneseq
          %v1015 = vshrl.u32 %v1014, 7
          %v1016 = vsub.s32 3, %v1015
          %v1017 = vrot.slane %v1000, %v1016
          %v1022 = vmul.f32 %v996, %v1005
          %v1023 = vmul.f32 %v997, %v1009
          %v1024 = vmul.f32 %v998, %v1013
          %v1025 = vmul.f32 %v999, %v1017
          %v1026 = vld [vmem:[#allocation9] sm:$0xf]
          %v1028 = vlaneseq
          %v1029 = vshrl.u32 %v1028, 7
          %v1030 = vsub.s32 0, %v1029
          %v1031 = vrot.slane %v1026, %v1030
          %v1032 = vlaneseq
          %v1033 = vshrl.u32 %v1032, 7
          %v1034 = vsub.s32 1, %v1033
          %v1035 = vrot.slane %v1026, %v1034
          %v1036 = vlaneseq
          %v1037 = vshrl.u32 %v1036, 7
          %v1038 = vsub.s32 2, %v1037
          %v1039 = vrot.slane %v1026, %v1038
          %v1040 = vlaneseq
          %v1041 = vshrl.u32 %v1040, 7
          %v1042 = vsub.s32 3, %v1041
          %v1043 = vrot.slane %v1026, %v1042
          %v1048 = vadd.f32 %v1022, %v1031
          %v1049 = vadd.f32 %v1023, %v1035
          %v1050 = vadd.f32 %v1024, %v1039
          %v1051 = vadd.f32 %v1025, %v1043
          %v1052 = vmax.f32 %v1048, 0.0
          %v1053 = vmax.f32 %v1049, 0.0
          %v1054 = vmax.f32 %v1050, 0.0
          %v1055 = vmax.f32 %v1051, 0.0
          %v1056 = vld [vmem:[#allocation11] sm:$0xff]
          %v1057 = vld [vmem:[#allocation11 + $0x8] sm:$0xff]
          %v1058 = vld [vmem:[#allocation11 + $0x10] sm:$0xff]
          %v1059 = vld [vmem:[#allocation11 + $0x18] sm:$0xff]
          %v1060 = vld [vmem:[#allocation11 + $0x20] sm:$0xff]
          %v1061 = vld [vmem:[#allocation11 + $0x28] sm:$0xff]
          %v1062 = vld [vmem:[#allocation11 + $0x30] sm:$0xff]
          %v1063 = vld [vmem:[#allocation11 + $0x38] sm:$0xff]
          %v1064 = vld [vmem:[#allocation11 + $0x40] sm:$0xff]
          %v1065 = vld [vmem:[#allocation11 + $0x48] sm:$0xff]
          %v1066 = vld [vmem:[#allocation11 + $0x50] sm:$0xff]
          %v1067 = vld [vmem:[#allocation11 + $0x58] sm:$0xff]
          %v1068 = vld [vmem:[#allocation11 + $0x60] sm:$0xff]
          %v1069 = vld [vmem:[#allocation11 + $0x68] sm:$0xff]
          %v1070 = vld [vmem:[#allocation11 + $0x70] sm:$0xff]
          %v1071 = vld [vmem:[#allocation11 + $0x78] sm:$0xff]
          %v1072 = vld [vmem:[#allocation11 + $0x80] sm:$0xff]
          %v1073 = vld [vmem:[#allocation11 + $0x88] sm:$0xff]
          %v1074 = vld [vmem:[#allocation11 + $0x90] sm:$0xff]
          %v1075 = vld [vmem:[#allocation11 + $0x98] sm:$0xff]
          %v1076 = vld [vmem:[#allocation11 + $0xa0] sm:$0xff]
          %v1077 = vld [vmem:[#allocation11 + $0xa8] sm:$0xff]
          %v1078 = vld [vmem:[#allocation11 + $0xb0] sm:$0xff]
          %v1079 = vld [vmem:[#allocation11 + $0xb8] sm:$0xff]
          %v1080 = vld [vmem:[#allocation11 + $0xc0] sm:$0xff]
          %v1081 = vld [vmem:[#allocation11 + $0xc8] sm:$0xff]
          %v1082 = vld [vmem:[#allocation11 + $0xd0] sm:$0xff]
          %v1083 = vld [vmem:[#allocation11 + $0xd8] sm:$0xff]
          %v1084 = vld [vmem:[#allocation11 + $0xe0] sm:$0xff]
          %v1085 = vld [vmem:[#allocation11 + $0xe8] sm:$0xff]
          %v1086 = vld [vmem:[#allocation11 + $0xf0] sm:$0xff]
          %v1087 = vld [vmem:[#allocation11 + $0xf8] sm:$0xff]
          %v1088 = vld [vmem:[#allocation11 + $0x100] sm:$0xff]
          %v1089 = vld [vmem:[#allocation11 + $0x108] sm:$0xff]
          %v1090 = vld [vmem:[#allocation11 + $0x110] sm:$0xff]
          %v1091 = vld [vmem:[#allocation11 + $0x118] sm:$0xff]
          %v1092 = vld [vmem:[#allocation11 + $0x120] sm:$0xff]
          %v1093 = vld [vmem:[#allocation11 + $0x128] sm:$0xff]
          %v1094 = vld [vmem:[#allocation11 + $0x130] sm:$0xff]
          %v1095 = vld [vmem:[#allocation11 + $0x138] sm:$0xff]
          %v1096 = vld [vmem:[#allocation11 + $0x140] sm:$0xff]
          %v1097 = vld [vmem:[#allocation11 + $0x148] sm:$0xff]
          %v1098 = vld [vmem:[#allocation11 + $0x150] sm:$0xff]
          %v1099 = vld [vmem:[#allocation11 + $0x158] sm:$0xff]
          %v1100 = vld [vmem:[#allocation11 + $0x160] sm:$0xff]
          %v1101 = vld [vmem:[#allocation11 + $0x168] sm:$0xff]
          %v1102 = vld [vmem:[#allocation11 + $0x170] sm:$0xff]
          %v1103 = vld [vmem:[#allocation11 + $0x178] sm:$0xff]
          %v1104 = vld [vmem:[#allocation11 + $0x180] sm:$0xff]
          %v1105 = vld [vmem:[#allocation11 + $0x188] sm:$0xff]
          %v1106 = vld [vmem:[#allocation11 + $0x190] sm:$0xff]
          %v1107 = vld [vmem:[#allocation11 + $0x198] sm:$0xff]
          %v1108 = vld [vmem:[#allocation11 + $0x1a0] sm:$0xff]
          %v1109 = vld [vmem:[#allocation11 + $0x1a8] sm:$0xff]
          %v1110 = vld [vmem:[#allocation11 + $0x1b0] sm:$0xff]
          %v1111 = vld [vmem:[#allocation11 + $0x1b8] sm:$0xff]
          %v1112 = vld [vmem:[#allocation11 + $0x1c0] sm:$0xff]
          %v1113 = vld [vmem:[#allocation11 + $0x1c8] sm:$0xff]
          %v1114 = vld [vmem:[#allocation11 + $0x1d0] sm:$0xff]
          %v1115 = vld [vmem:[#allocation11 + $0x1d8] sm:$0xff]
          %v1116 = vld [vmem:[#allocation11 + $0x1e0] sm:$0xff]
          %v1117 = vld [vmem:[#allocation11 + $0x1e8] sm:$0xff]
          %v1118 = vld [vmem:[#allocation11 + $0x1f0] sm:$0xff]
          %v1119 = vld [vmem:[#allocation11 + $0x1f8] sm:$0xff]
          %v1120 = vld [vmem:[#allocation12] sm:$0x1]
          %v1122 = vlaneseq
          %v1123 = vshrl.u32 %v1122, 7
          %v1124 = vsub.s32 0, %v1123
          %v1125 = vrot.slane %v1120, %v1124
          %1127 = vmatprep.subr.mxu0 0.0
          %1128 = vmatpush1.msra.mxu0 %v1071
          %1129 = vmatprep.subr.mxu0 0.0
          %1130 = vmatpush1.msra.mxu0 %v1070
          %1131 = vmatprep.subr.mxu0 0.0
          %1132 = vmatpush1.msra.mxu0 %v1069
          %1133 = vmatprep.subr.mxu0 0.0
          %1134 = vmatpush1.msra.mxu0 %v1068
          %1135 = vmatprep.subr.mxu0 0.0
          %1136 = vmatpush1.msra.mxu0 %v1067
          %1137 = vmatprep.subr.mxu0 0.0
          %1138 = vmatpush1.msra.mxu0 %v1066
          %1139 = vmatprep.subr.mxu0 0.0
          %1140 = vmatpush1.msra.mxu0 %v1065
          %1141 = vmatprep.subr.mxu0 0.0
          %1142 = vmatpush1.msra.mxu0 %v1064
          %1143 = vmatprep.subr.mxu0 0.0
          %1144 = vmatpush1.msra.mxu0 %v1063
          %1145 = vmatprep.subr.mxu0 0.0
          %1146 = vmatpush1.msra.mxu0 %v1062
          %1147 = vmatprep.subr.mxu0 0.0
          %1148 = vmatpush1.msra.mxu0 %v1061
          %1149 = vmatprep.subr.mxu0 0.0
          %1150 = vmatpush1.msra.mxu0 %v1060
          %1151 = vmatprep.subr.mxu0 0.0
          %1152 = vmatpush1.msra.mxu0 %v1059
          %1153 = vmatprep.subr.mxu0 0.0
          %1154 = vmatpush1.msra.mxu0 %v1058
          %1155 = vmatprep.subr.mxu0 0.0
          %1156 = vmatpush1.msra.mxu0 %v1057
          %1157 = vmatprep.subr.mxu0 0.0
          %1158 = vmatpush1.msra.mxu0 %v1056
          %1159 = vmatprep.subr.mxu0 0.0
          %1160 = vmatpush2.msra.mxu0 %v1087
          %1161 = vmatprep.subr.mxu0 0.0
          %1162 = vmatpush2.msra.mxu0 %v1086
          %1163 = vmatprep.subr.mxu0 0.0
          %1164 = vmatpush2.msra.mxu0 %v1085
          %1165 = vmatprep.subr.mxu0 0.0
          %1166 = vmatpush2.msra.mxu0 %v1084
          %1167 = vmatprep.subr.mxu0 0.0
          %1168 = vmatpush2.msra.mxu0 %v1083
          %1169 = vmatprep.subr.mxu0 0.0
          %1170 = vmatpush2.msra.mxu0 %v1082
          %1171 = vmatprep.subr.mxu0 0.0
          %1172 = vmatpush2.msra.mxu0 %v1081
          %1173 = vmatprep.subr.mxu0 0.0
          %1174 = vmatpush2.msra.mxu0 %v1080
          %1175 = vmatprep.subr.mxu0 0.0
          %1176 = vmatpush2.msra.mxu0 %v1079
          %1177 = vmatprep.subr.mxu0 0.0
          %1178 = vmatpush2.msra.mxu0 %v1078
          %1179 = vmatprep.subr.mxu0 0.0
          %1180 = vmatpush2.msra.mxu0 %v1077
          %1181 = vmatprep.subr.mxu0 0.0
          %1182 = vmatpush2.msra.mxu0 %v1076
          %1183 = vmatprep.subr.mxu0 0.0
          %1184 = vmatpush2.msra.mxu0 %v1075
          %1185 = vmatprep.subr.mxu0 0.0
          %1186 = vmatpush2.msra.mxu0 %v1074
          %1187 = vmatprep.subr.mxu0 0.0
          %1188 = vmatpush2.msra.mxu0 %v1073
          %1189 = vmatprep.subr.mxu0 0.0
          %1190 = vmatpush2.msra.mxu0 %v1072
          %1191 = vmatprep.mubr.f32.mxu0 %v1053
          %1192 = vmatmul.mubr.f32.gmra.mxu0 %v1052
          %v1193 = vpop.f32.mrf.mxu0
          %v1194 = vadd.f32 %v1125, %v1193
          %v1195 = vpop.f32.mrf.mxu0
          %1196 = vdwg.mxu0
          %1197 = vmatprep.subr.mxu0 0.0
          %1198 = vmatpush1.msra.mxu0 %v1103
          %1199 = vmatprep.subr.mxu0 0.0
          %1200 = vmatpush1.msra.mxu0 %v1102
          %1201 = vmatprep.subr.mxu0 0.0
          %1202 = vmatpush1.msra.mxu0 %v1101
          %1203 = vmatprep.subr.mxu0 0.0
          %1204 = vmatpush1.msra.mxu0 %v1100
          %1205 = vmatprep.subr.mxu0 0.0
          %1206 = vmatpush1.msra.mxu0 %v1099
          %1207 = vmatprep.subr.mxu0 0.0
          %1208 = vmatpush1.msra.mxu0 %v1098
          %1209 = vmatprep.subr.mxu0 0.0
          %1210 = vmatpush1.msra.mxu0 %v1097
          %1211 = vmatprep.subr.mxu0 0.0
          %1212 = vmatpush1.msra.mxu0 %v1096
          %1213 = vmatprep.subr.mxu0 0.0
          %1214 = vmatpush1.msra.mxu0 %v1095
          %1215 = vmatprep.subr.mxu0 0.0
          %1216 = vmatpush1.msra.mxu0 %v1094
          %1217 = vmatprep.subr.mxu0 0.0
          %1218 = vmatpush1.msra.mxu0 %v1093
          %1219 = vmatprep.subr.mxu0 0.0
          %1220 = vmatpush1.msra.mxu0 %v1092
          %1221 = vmatprep.subr.mxu0 0.0
          %1222 = vmatpush1.msra.mxu0 %v1091
          %1223 = vmatprep.subr.mxu0 0.0
          %1224 = vmatpush1.msra.mxu0 %v1090
          %1225 = vmatprep.subr.mxu0 0.0
          %1226 = vmatpush1.msra.mxu0 %v1089
          %1227 = vmatprep.subr.mxu0 0.0
          %1228 = vmatpush1.msra.mxu0 %v1088
          %1229 = vmatprep.subr.mxu0 0.0
          %1230 = vmatpush2.msra.mxu0 %v1119
          %1231 = vmatprep.subr.mxu0 0.0
          %1232 = vmatpush2.msra.mxu0 %v1118
          %1233 = vmatprep.subr.mxu0 0.0
          %1234 = vmatpush2.msra.mxu0 %v1117
          %1235 = vmatprep.subr.mxu0 0.0
          %1236 = vmatpush2.msra.mxu0 %v1116
          %1237 = vmatprep.subr.mxu0 0.0
          %1238 = vmatpush2.msra.mxu0 %v1115
          %1239 = vmatprep.subr.mxu0 0.0
          %1240 = vmatpush2.msra.mxu0 %v1114
          %1241 = vmatprep.subr.mxu0 0.0
          %1242 = vmatpush2.msra.mxu0 %v1113
          %1243 = vmatprep.subr.mxu0 0.0
          %1244 = vmatpush2.msra.mxu0 %v1112
          %1245 = vmatprep.subr.mxu0 0.0
          %1246 = vmatpush2.msra.mxu0 %v1111
          %1247 = vmatprep.subr.mxu0 0.0
          %1248 = vmatpush2.msra.mxu0 %v1110
          %1249 = vmatprep.subr.mxu0 0.0
          %1250 = vmatpush2.msra.mxu0 %v1109
          %1251 = vmatprep.subr.mxu0 0.0
          %1252 = vmatpush2.msra.mxu0 %v1108
          %1253 = vmatprep.subr.mxu0 0.0
          %1254 = vmatpush2.msra.mxu0 %v1107
          %1255 = vmatprep.subr.mxu0 0.0
          %1256 = vmatpush2.msra.mxu0 %v1106
          %1257 = vmatprep.subr.mxu0 0.0
          %1258 = vmatpush2.msra.mxu0 %v1105
          %1259 = vmatprep.subr.mxu0 0.0
          %1260 = vmatpush2.msra.mxu0 %v1104
          %1261 = vmatprep.mubr.f32.mxu0 %v1055
          %1262 = vmatmul.mubr.f32.gmra.mxu0 %v1054
          %v1263 = vpop.f32.mrf.mxu0
          %v1264 = vadd.f32 %v1194, %v1263
          %v1265 = vpop.f32.mrf.mxu0
          %1266 = vdwg.mxu0
          %v1267 = vmul.f32 %v1264, %v1264
          %1268 = vadd.xlane.f32.xlu0 %v1267
          %v1269 = vpop.xlane.xlu0 %1268
          %v1270 = vmax.f32 %v1269, 1e-24
          %v1271 = vrsqrt.pop %v1270
          %v1272 = vmul.f32 %v1264, %v1271
          %1273 = vst [vmem:[#allocation14] sm:$0xff] %v1272
        $region76: #{tpu_custom_call.1} parent=43 // pred_fallthru
          _
        // Predicated region
        $region77: #{tpu_custom_call.1} parent=43 // pred_check
          %p1274 = pneg %p175
        $region78: #{tpu_custom_call.1} parent=43 // pred_check_branch
          %1276 = sbr.rel (%p1274) target = $region80
        $region79: #{tpu_custom_call.1} parent=43 // pred_region
          %s1278 = ssub.s32 128, 128
          %1279 = vsyncadd [#allocation5], %s1278
          %s1281 = sshll.u32 [#allocation14], 4
          %s1282 = int_to_ptr.vmem [resolvable:$true] %s1281
          %1284 = dma.vmem_to_hbm [thread:$0]  %s1282, 128, %s6, [#allocation5]
        $region80: #{tpu_custom_call.1} parent=43 // pred_fallthru
          _
        // Predicated region
        $region81: #{tpu_custom_call.1} parent=43 // pred_check
          %p1285 = pneg %p175
        $region82: #{tpu_custom_call.1} parent=43 // pred_check_branch
          %1287 = sbr.rel (%p1285) target = $region84
        $region83: #{tpu_custom_call.1} parent=43 // pred_region
          %1288 = dma.done [#allocation5], 128
        $region84: #{tpu_custom_call.1} parent=43 // pred_fallthru
          _
      $region44: #{tpu_custom_call.1} parent=5 // pred_fallthru
        _
      %p1289 = scmp.le.s32.totalorder 2, %s21
      // Predicated region
      $region85: #{tpu_custom_call.1} parent=5 // pred_check
        %p1290 = pneg %p1289
      $region86: #{tpu_custom_call.1} parent=5 // pred_check_branch
        %1292 = sbr.rel (%p1290) target = $region88
      $region87: #{tpu_custom_call.1} parent=5 // pred_region
        %s1293 = ssub.s32 %s21, 2
      $region88: #{tpu_custom_call.1} parent=5 // pred_fallthru
        _
    $region6: #{tpu_custom_call.1} parent=1 // loop_footer
      %s25 = sadd.s32 1, %s21
    $region7: #{tpu_custom_call.1} parent=1 // loop_footer_branch
      %20 = sbr.rel target = $region3
    $region8: #{tpu_custom_call.1} parent=1 // loop_exit
      _
    %1294 = vsyncpa [#allocation4], 1
    %s1295 = scalar_lea.sflag [#allocation4], 1
    %1296 = vsyncpa %s1295, 1
    %1297 = vsyncpa [#allocation7], 1
    %s1298 = scalar_lea.sflag [#allocation7], 1
    %1299 = vsyncpa %s1298, 1
    %1300 = vsyncpa [#allocation10], 1
    %1301 = vsyncpa [#allocation13], 1
    %1302 = vsyncpa [#allocation5], 1
    %s1303 = scalar_lea.sflag [#allocation5], 1
    %1304 = vsyncpa %s1303, 1

</llo_original>
